<compile_context>
chip_gen: v5e
topology: v5e:2x2
jax: 0.10.0
libtpu: 0.0.40
codegen_flags: <defaults>
</compile_context>

<pallas_src>
import math

import jax
import jax.numpy as jnp
from jax.experimental import pallas as pl
from jax.experimental.pallas import tpu as pltpu

# ---- toy configuration (small shapes consistent with the module) -----------
HIDDEN = 256                     # hidden_size
NUM_HEADS = 2                    # num_attention_heads
HEAD_DIM = HIDDEN // NUM_HEADS   # 128 -> lane-dense head dim
FF = 256                         # MLP intermediate width (w1 / w2 output)
SEQ_LENGTH = 64                  # rotary table length (>= past + new tokens)
EPS = 1e-6                       # RMSNorm epsilon
ATTN_SCALE = 1.0 / math.sqrt(HEAD_DIM)


def _rmsnorm(x, w):
    # x: (S, H) f32, w: (1, H) f32
    var = jnp.mean(x * x, axis=-1, keepdims=True)
    return x * jax.lax.rsqrt(var + EPS) * w


# ---- single fused kernel: ln_1 + QKV + RoPE + cache-append + attention
#      + c_proj + residual + ln_2 + SwiGLU MLP + residual --------------------
def fused_block_kernel(x_ref, cos_ref, sin_ref, ln1_ref, wqkv_ref, bqkv_ref,
                       pk_ref, pv_ref, mask_ref, cproj_ref, ln2_ref,
                       w1_ref, w2_ref, wmlp_ref,
                       o_ref, pk_out_ref, pv_out_ref):
    f32 = jnp.float32
    D = HEAD_DIM
    H = HIDDEN

    x = x_ref[...]                                         # (S_new, H)

    # --- ln_1 + fused QKV projection (one MXU matmul) ------------------------
    h = _rmsnorm(x, ln1_ref[...])
    qkv = jnp.dot(h, wqkv_ref[...], preferred_element_type=f32) + bqkv_ref[...]

    # --- rotate-half RoPE (sign pre-baked into sin table) --------------------
    cos = cos_ref[...]                                     # (S_new, D)
    sin_s = sin_ref[...]                                   # (S_new, D), signed

    def rope(t):                                           # t: (S_new, D)
        return t * cos + pltpu.roll(t, shift=D // 2, axis=1) * sin_s

    q_heads = []
    k_heads = []
    for hd in range(NUM_HEADS):                            # static unroll
        q_h = qkv[:, hd * D:(hd + 1) * D]                  # lane-aligned slice
        k_h = qkv[:, H + hd * D:H + (hd + 1) * D]
        q_heads.append(rope(q_h) * ATTN_SCALE)             # fold scale into q
        k_heads.append(rope(k_h))

    k_new = jnp.concatenate(k_heads, axis=1)               # (S_new, H)
    v_new = qkv[:, 2 * H:3 * H]                            # (S_new, H)

    # --- KV-cache append inside the kernel (lane-dense full-tile stores) -----
    k_tot = jnp.concatenate([pk_ref[...], k_new], axis=0)  # (S_tot, H)
    v_tot = jnp.concatenate([pv_ref[...], v_new], axis=0)
    pk_out_ref[...] = k_tot
    pv_out_ref[...] = v_tot

    # --- attention (heads unrolled; q already scaled) -------------------------
    mask = mask_ref[...]                                   # (S_new, S_tot)
    ctx_heads = []
    for hd in range(NUM_HEADS):
        k_h = k_tot[:, hd * D:(hd + 1) * D]                # (S_tot, D)
        v_h = v_tot[:, hd * D:(hd + 1) * D]
        s = jax.lax.dot_general(q_heads[hd], k_h, (((1,), (1,)), ((), ())),
                                preferred_element_type=f32) + mask
        m = jnp.max(s, axis=-1, keepdims=True)
        e = jnp.exp(s - m)
        p = e * pl.reciprocal(jnp.sum(e, axis=-1, keepdims=True), approx=True)
        ctx_heads.append(jnp.dot(p, v_h, preferred_element_type=f32))
    ctx = jnp.concatenate(ctx_heads, axis=1)               # (S_new, H)

    # --- c_proj + residual + ln_2 + SwiGLU MLP + residual ---------------------
    attn_out = jnp.dot(ctx, cproj_ref[...], preferred_element_type=f32)
    ln_in = attn_out + x
    h2 = _rmsnorm(ln_in, ln2_ref[...])
    a1 = jnp.dot(h2, w1_ref[...], preferred_element_type=f32)
    a2 = jnp.dot(h2, w2_ref[...], preferred_element_type=f32)
    silu = a2 * pl.reciprocal(1.0 + jnp.exp(-a2), approx=True)   # silu(a2)
    o_ref[...] = ln_in + jnp.dot(a1 * silu, wmlp_ref[...],
                                 preferred_element_type=f32)


# ---- wrapper ----------------------------------------------------------------
def qwen_block_cache_forward(hidden_states, position_ids, attention_mask,
                             past_k, past_v, params):
    """hidden_states: (1, S_new, H) f32, position_ids: (1, S_new) i32,
    attention_mask: (1, 1, S_new, S_tot) additive f32,
    past_k/past_v: (1, S_past, NUM_HEADS, HEAD_DIM) f32.
    Returns (hidden_out, present_k, present_v), all float32."""
    B, S_new, H = hidden_states.shape
    assert B == 1 and H == HIDDEN, "toy wrapper handles batch=1"
    S_past = past_k.shape[1]
    S_tot = S_past + S_new
    f32 = jnp.float32

    x = hidden_states[0].astype(f32)                        # (S_new, H)

    # rotary-table gather at position_ids; bake the rotate-half sign into sin.
    pos = position_ids.reshape(-1)
    cos = jnp.take(params["cos_emb"], pos, axis=0)           # (S_new, D)
    sin = jnp.take(params["sin_emb"], pos, axis=0)
    half = HEAD_DIM // 2
    sign = jnp.concatenate([-jnp.ones((half,), f32), jnp.ones((half,), f32)])
    sin_signed = sin * sign[None, :]

    # flat lane-dense cache layout (contiguous reshape, no transpose/relayout)
    pk_flat = past_k[0].astype(f32).reshape(S_past, HIDDEN)  # (S_past, NH*D)
    pv_flat = past_v[0].astype(f32).reshape(S_past, HIDDEN)
    mask2d = attention_mask.reshape(S_new, S_tot).astype(f32)

    def full(shape):
        return pl.BlockSpec(shape, lambda i, _n=len(shape): (0,) * _n)

    out_shape = (
        jax.ShapeDtypeStruct((S_new, HIDDEN), f32),          # hidden out
        jax.ShapeDtypeStruct((S_tot, HIDDEN), f32),          # present_k (flat)
        jax.ShapeDtypeStruct((S_tot, HIDDEN), f32),          # present_v (flat)
    )

    hidden_out, pk_out, pv_out = pl.pallas_call(
        fused_block_kernel,
        out_shape=out_shape,
        grid=(1,),
        in_specs=[
            full((S_new, HIDDEN)),             # x
            full((S_new, HEAD_DIM)),           # cos
            full((S_new, HEAD_DIM)),           # sin (signed)
            full((1, HIDDEN)),                 # ln1_w
            full((HIDDEN, 3 * HIDDEN)),        # c_attn_w
            full((1, 3 * HIDDEN)),             # c_attn_b
            full((S_past, HIDDEN)),            # past_k flat
            full((S_past, HIDDEN)),            # past_v flat
            full((S_new, S_tot)),              # additive mask
            full((HIDDEN, HIDDEN)),            # c_proj_w
            full((1, HIDDEN)),                 # ln2_w
            full((HIDDEN, FF)),                # w1
            full((HIDDEN, FF)),                # w2
            full((FF, HIDDEN)),                # mlp c_proj
        ],
        out_specs=[
            full((S_new, HIDDEN)),
            full((S_tot, HIDDEN)),
            full((S_tot, HIDDEN)),
        ],
        compiler_params=pltpu.CompilerParams(
            dimension_semantics=("arbitrary",)),
    )(x, cos, sin_signed, params["ln1_w"], params["c_attn_w"],
      params["c_attn_b"], pk_flat, pv_flat, mask2d, params["c_proj_w"],
      params["ln2_w"], params["w1"], params["w2"], params["mlp_cproj"])

    # outputs: hidden_states.float(), present_k.float(), present_v.float()
    hidden = hidden_out[None].astype(f32)                               # (1,S,H)
    present_k = pk_out.reshape(1, S_tot, NUM_HEADS, HEAD_DIM).astype(f32)
    present_v = pv_out.reshape(1, S_tot, NUM_HEADS, HEAD_DIM).astype(f32)
    return hidden, present_k, present_v


# ---- pure-jnp reference ------------------------------------------------------
def ref_forward(hidden_states, position_ids, attention_mask, past_k, past_v, p):
    B, S_new, H = hidden_states.shape
    S_past = past_k.shape[1]
    S_tot = S_past + S_new
    x = hidden_states[0].astype(jnp.float32)

    def rmsnorm(t, w):
        var = jnp.mean(t * t, axis=-1, keepdims=True)
        return t * jax.lax.rsqrt(var + EPS) * w

    h = rmsnorm(x, p["ln1_w"])
    qkv = h @ p["c_attn_w"] + p["c_attn_b"]
    q, k, v = jnp.split(qkv, 3, axis=-1)
    q = q.reshape(S_new, NUM_HEADS, HEAD_DIM)
    k = k.reshape(S_new, NUM_HEADS, HEAD_DIM)
    v = v.reshape(S_new, NUM_HEADS, HEAD_DIM)

    pos = position_ids.reshape(-1)
    cos = jnp.take(p["cos_emb"], pos, axis=0)
    sin = jnp.take(p["sin_emb"], pos, axis=0)

    def rope(t):
        t1 = t[..., : HEAD_DIM // 2]
        t2 = t[..., HEAD_DIM // 2:]
        rot = jnp.concatenate([-t2, t1], axis=-1)
        return t * cos[:, None, :] + rot * sin[:, None, :]

    q = rope(q)
    k = rope(k)

    k_tot = jnp.concatenate([past_k[0].astype(jnp.float32), k], axis=0)
    v_tot = jnp.concatenate([past_v[0].astype(jnp.float32), v], axis=0)

    qh = q.transpose(1, 0, 2)
    kh = k_tot.transpose(1, 0, 2)
    vh = v_tot.transpose(1, 0, 2)
    mask2d = attention_mask.reshape(S_new, S_tot)
    s = jnp.einsum("hqd,hkd->hqk", qh, kh) * ATTN_SCALE + mask2d[None]
    m = jnp.max(s, axis=-1, keepdims=True)
    e = jnp.exp(s - m)
    pw = e / jnp.sum(e, axis=-1, keepdims=True)
    ctx = jnp.einsum("hqk,hkd->hqd", pw, vh)
    ctx = ctx.transpose(1, 0, 2).reshape(S_new, H)

    attn_out = ctx @ p["c_proj_w"]
    ln_in = attn_out + x
    h2 = rmsnorm(ln_in, p["ln2_w"])
    a1 = h2 @ p["w1"]
    a2 = h2 @ p["w2"]
    inter = a1 * (a2 * (1.0 / (1.0 + jnp.exp(-a2))))
    out = ln_in + inter @ p["mlp_cproj"]

    return (out[None].astype(jnp.float32),
            k_tot[None].astype(jnp.float32),
            v_tot[None].astype(jnp.float32))


if __name__ == "__main__":
    B, S_new, S_past = 1, 8, 24
    S_tot = S_past + S_new

    key = jax.random.PRNGKey(0)
    keys = jax.random.split(key, 11)

    def nrm(k, shape, scale):
        return jax.random.normal(k, shape, dtype=jnp.float32) * scale

    params = {
        "ln1_w": 1.0 + nrm(keys[0], (1, HIDDEN), 0.1),
        "c_attn_w": nrm(keys[1], (HIDDEN, 3 * HIDDEN), 0.05),
        "c_attn_b": nrm(keys[2], (1, 3 * HIDDEN), 0.05),
        "c_proj_w": nrm(keys[3], (HIDDEN, HIDDEN), 0.05),
        "ln2_w": 1.0 + nrm(keys[4], (1, HIDDEN), 0.1),
        "w1": nrm(keys[5], (HIDDEN, FF), 0.05),
        "w2": nrm(keys[6], (HIDDEN, FF), 0.05),
        "mlp_cproj": nrm(keys[7], (FF, HIDDEN), 0.05),
    }

    # rotary tables == rotary_emb(SEQ_LENGTH).view(SEQ_LENGTH, HEAD_DIM)
    positions = jnp.arange(SEQ_LENGTH, dtype=jnp.float32)
    inv_freq = 1.0 / (10000.0 ** (jnp.arange(0, HEAD_DIM, 2,
                                             dtype=jnp.float32) / HEAD_DIM))
    freqs = positions[:, None] * inv_freq[None, :]
    emb = jnp.concatenate([freqs, freqs], axis=-1)           # (SEQ, D)
    params["cos_emb"] = jnp.cos(emb)
    params["sin_emb"] = jnp.sin(emb)

    hidden_states = nrm(keys[8], (B, S_new, HIDDEN), 0.5)
    past_k = nrm(keys[9], (B, S_past, NUM_HEADS, HEAD_DIM), 0.5)
    past_v = nrm(keys[10], (B, S_past, NUM_HEADS, HEAD_DIM), 0.5)
    position_ids = (S_past + jnp.arange(S_new, dtype=jnp.int32))[None, :]

    # additive causal mask over [past | new]: 0 = attend, -30000 = blocked
    jj = jnp.arange(S_tot)[None, :]
    ii = jnp.arange(S_new)[:, None]
    attention_mask = jnp.where(jj <= (S_past + ii), 0.0, -30000.0)
    attention_mask = attention_mask.astype(jnp.float32)[None, None]  # (1,1,S,S_tot)

    fwd = jax.jit(qwen_block_cache_forward)
    h_out, pk, pv = fwd(hidden_states, position_ids, attention_mask,
                        past_k, past_v, params)
    h_out, pk, pv = jax.block_until_ready((h_out, pk, pv))

    h_ref, pk_ref, pv_ref = ref_forward(hidden_states, position_ids,
                                        attention_mask, past_k, past_v, params)

    assert h_out.shape == (B, S_new, HIDDEN) and h_out.dtype == jnp.float32
    assert pk.shape == (B, S_tot, NUM_HEADS, HEAD_DIM) and pk.dtype == jnp.float32
    assert pv.shape == (B, S_tot, NUM_HEADS, HEAD_DIM) and pv.dtype == jnp.float32
    assert jnp.allclose(h_out, h_ref, atol=2e-2, rtol=2e-2), "hidden mismatch"
    assert jnp.allclose(pk, pk_ref, atol=2e-2, rtol=2e-2), "present_k mismatch"
    assert jnp.allclose(pv, pv_ref, atol=2e-2, rtol=2e-2), "present_v mismatch"

    print("KERNEL_OK")
</pallas_src>

<mosaic_0001>
module attributes {stable_mosaic.version = 11 : i64} {
  func.func @fused_block_kernel(%arg0: i32, %arg1: memref<8x256xf32, #tpu.memory_space<vmem>>, %arg2: memref<8x128xf32, #tpu.memory_space<vmem>>, %arg3: memref<8x128xf32, #tpu.memory_space<vmem>>, %arg4: memref<1x256xf32, #tpu.memory_space<vmem>>, %arg5: memref<256x768xf32, #tpu.memory_space<vmem>>, %arg6: memref<1x768xf32, #tpu.memory_space<vmem>>, %arg7: memref<24x256xf32, #tpu.memory_space<vmem>>, %arg8: memref<24x256xf32, #tpu.memory_space<vmem>>, %arg9: memref<8x32xf32, #tpu.memory_space<vmem>>, %arg10: memref<256x256xf32, #tpu.memory_space<vmem>>, %arg11: memref<1x256xf32, #tpu.memory_space<vmem>>, %arg12: memref<256x256xf32, #tpu.memory_space<vmem>>, %arg13: memref<256x256xf32, #tpu.memory_space<vmem>>, %arg14: memref<256x256xf32, #tpu.memory_space<vmem>>, %arg15: memref<8x256xf32, #tpu.memory_space<vmem>>, %arg16: memref<32x256xf32, #tpu.memory_space<vmem>>, %arg17: memref<32x256xf32, #tpu.memory_space<vmem>>) attributes {dimension_semantics = [#tpu.dimension_semantics<arbitrary>], iteration_bounds = array<i64: 1>, scalar_prefetch = 0 : i64, scratch_operands = 0 : i64, tpu.core_type = #tpu.core_type<tc>, window_params = [{pipeline_mode = #tpu.pipeline_mode<synchronous>, transform_indices = @transform_0, window_bounds = array<i64: 8, 256>}, {pipeline_mode = #tpu.pipeline_mode<synchronous>, transform_indices = @transform_1, window_bounds = array<i64: 8, 128>}, {pipeline_mode = #tpu.pipeline_mode<synchronous>, transform_indices = @transform_2, window_bounds = array<i64: 8, 128>}, {pipeline_mode = #tpu.pipeline_mode<synchronous>, transform_indices = @transform_3, window_bounds = array<i64: 1, 256>}, {pipeline_mode = #tpu.pipeline_mode<synchronous>, transform_indices = @transform_4, window_bounds = array<i64: 256, 768>}, {pipeline_mode = #tpu.pipeline_mode<synchronous>, transform_indices = @transform_5, window_bounds = array<i64: 1, 768>}, {pipeline_mode = #tpu.pipeline_mode<synchronous>, transform_indices = @transform_6, window_bounds = array<i64: 24, 256>}, {pipeline_mode = #tpu.pipeline_mode<synchronous>, transform_indices = @transform_7, window_bounds = array<i64: 24, 256>}, {pipeline_mode = #tpu.pipeline_mode<synchronous>, transform_indices = @transform_8, window_bounds = array<i64: 8, 32>}, {pipeline_mode = #tpu.pipeline_mode<synchronous>, transform_indices = @transform_9, window_bounds = array<i64: 256, 256>}, {pipeline_mode = #tpu.pipeline_mode<synchronous>, transform_indices = @transform_10, window_bounds = array<i64: 1, 256>}, {pipeline_mode = #tpu.pipeline_mode<synchronous>, transform_indices = @transform_11, window_bounds = array<i64: 256, 256>}, {pipeline_mode = #tpu.pipeline_mode<synchronous>, transform_indices = @transform_12, window_bounds = array<i64: 256, 256>}, {pipeline_mode = #tpu.pipeline_mode<synchronous>, transform_indices = @transform_13, window_bounds = array<i64: 256, 256>}, {pipeline_mode = #tpu.pipeline_mode<synchronous>, transform_indices = @transform_14, window_bounds = array<i64: 8, 256>}, {pipeline_mode = #tpu.pipeline_mode<synchronous>, transform_indices = @transform_15, window_bounds = array<i64: 32, 256>}, {pipeline_mode = #tpu.pipeline_mode<synchronous>, transform_indices = @transform_16, window_bounds = array<i64: 32, 256>}]} {
    %c0 = arith.constant 0 : index
    %c0_0 = arith.constant 0 : index
    %0 = vector.load %arg1[%c0, %c0_0] : memref<8x256xf32, #tpu.memory_space<vmem>>, vector<8x256xf32>
    %c0_1 = arith.constant 0 : index
    %c0_2 = arith.constant 0 : index
    %1 = vector.load %arg4[%c0_1, %c0_2] : memref<1x256xf32, #tpu.memory_space<vmem>>, vector<1x256xf32>
    %2 = arith.mulf %0, %0 : vector<8x256xf32>
    %cst = arith.constant dense<0.000000e+00> : vector<8xf32>
    %3 = vector.multi_reduction <add>, %2, %cst [1] : vector<8x256xf32> to vector<8xf32>
    %4 = vector.shape_cast %3 : vector<8xf32> to vector<8x1xf32>
    %cst_3 = arith.constant 2.560000e+02 : f32
    %5 = vector.broadcast %cst_3 : f32 to vector<8x1xf32>
    %6 = arith.divf %4, %5 : vector<8x1xf32>
    %cst_4 = arith.constant 9.99999997E-7 : f32
    %7 = vector.broadcast %cst_4 : f32 to vector<8x1xf32>
    %8 = arith.addf %6, %7 : vector<8x1xf32>
    %9 = math.rsqrt %8 : vector<8x1xf32>
    %10 = vector.broadcast %9 : vector<8x1xf32> to vector<8x256xf32>
    %11 = arith.mulf %0, %10 : vector<8x256xf32>
    %12 = vector.broadcast %1 : vector<1x256xf32> to vector<8x256xf32>
    %13 = arith.mulf %11, %12 : vector<8x256xf32>
    %c0_5 = arith.constant 0 : index
    %c0_6 = arith.constant 0 : index
    %14 = vector.load %arg5[%c0_5, %c0_6] : memref<256x768xf32, #tpu.memory_space<vmem>>, vector<256x768xf32>
    %cst_7 = arith.constant dense<0.000000e+00> : vector<8x768xf32>
    %15 = tpu.matmul %13, %14, %cst_7 {dimension_numbers = #tpu.dot_dimension_numbers<[1], [0], [0], [1], [0, 0, 1, 1], [], []>} : vector<8x256xf32>, vector<256x768xf32>, vector<8x768xf32> -> vector<8x768xf32>
    %c0_8 = arith.constant 0 : index
    %c0_9 = arith.constant 0 : index
    %16 = vector.load %arg6[%c0_8, %c0_9] : memref<1x768xf32, #tpu.memory_space<vmem>>, vector<1x768xf32>
    %17 = vector.broadcast %16 : vector<1x768xf32> to vector<8x768xf32>
    %18 = arith.addf %15, %17 : vector<8x768xf32>
    %c0_10 = arith.constant 0 : index
    %c0_11 = arith.constant 0 : index
    %19 = vector.load %arg2[%c0_10, %c0_11] : memref<8x128xf32, #tpu.memory_space<vmem>>, vector<8x128xf32>
    %c0_12 = arith.constant 0 : index
    %c0_13 = arith.constant 0 : index
    %20 = vector.load %arg3[%c0_12, %c0_13] : memref<8x128xf32, #tpu.memory_space<vmem>>, vector<8x128xf32>
    %21 = vector.extract_strided_slice %18 {offsets = [0, 0], sizes = [8, 128], strides = [1, 1]} : vector<8x768xf32> to vector<8x128xf32>
    %22 = vector.extract_strided_slice %18 {offsets = [0, 256], sizes = [8, 128], strides = [1, 1]} : vector<8x768xf32> to vector<8x128xf32>
    %23 = arith.mulf %21, %19 : vector<8x128xf32>
    %c64_i32 = arith.constant 64 : i32
    %24 = tpu.dynamic_rotate %21 by %c64_i32 dim 1 : vector<8x128xf32>, i32 -> vector<8x128xf32>
    %25 = arith.mulf %24, %20 : vector<8x128xf32>
    %26 = arith.addf %23, %25 : vector<8x128xf32>
    %cst_14 = arith.constant 0.0883883461 : f32
    %27 = vector.broadcast %cst_14 : f32 to vector<8x128xf32>
    %28 = arith.mulf %26, %27 : vector<8x128xf32>
    %29 = arith.mulf %22, %19 : vector<8x128xf32>
    %c64_i32_15 = arith.constant 64 : i32
    %30 = tpu.dynamic_rotate %22 by %c64_i32_15 dim 1 : vector<8x128xf32>, i32 -> vector<8x128xf32>
    %31 = arith.mulf %30, %20 : vector<8x128xf32>
    %32 = arith.addf %29, %31 : vector<8x128xf32>
    %33 = vector.extract_strided_slice %18 {offsets = [0, 128], sizes = [8, 128], strides = [1, 1]} : vector<8x768xf32> to vector<8x128xf32>
    %34 = vector.extract_strided_slice %18 {offsets = [0, 384], sizes = [8, 128], strides = [1, 1]} : vector<8x768xf32> to vector<8x128xf32>
    %35 = arith.mulf %33, %19 : vector<8x128xf32>
    %c64_i32_16 = arith.constant 64 : i32
    %36 = tpu.dynamic_rotate %33 by %c64_i32_16 dim 1 : vector<8x128xf32>, i32 -> vector<8x128xf32>
    %37 = arith.mulf %36, %20 : vector<8x128xf32>
    %38 = arith.addf %35, %37 : vector<8x128xf32>
    %cst_17 = arith.constant 0.0883883461 : f32
    %39 = vector.broadcast %cst_17 : f32 to vector<8x128xf32>
    %40 = arith.mulf %38, %39 : vector<8x128xf32>
    %41 = arith.mulf %34, %19 : vector<8x128xf32>
    %c64_i32_18 = arith.constant 64 : i32
    %42 = tpu.dynamic_rotate %34 by %c64_i32_18 dim 1 : vector<8x128xf32>, i32 -> vector<8x128xf32>
    %43 = arith.mulf %42, %20 : vector<8x128xf32>
    %44 = arith.addf %41, %43 : vector<8x128xf32>
    %45 = tpu.concatenate %32, %44 in 1 : vector<8x128xf32>, vector<8x128xf32> -> vector<8x256xf32>
    %46 = vector.extract_strided_slice %18 {offsets = [0, 512], sizes = [8, 256], strides = [1, 1]} : vector<8x768xf32> to vector<8x256xf32>
    %c0_19 = arith.constant 0 : index
    %c0_20 = arith.constant 0 : index
    %47 = vector.load %arg7[%c0_19, %c0_20] : memref<24x256xf32, #tpu.memory_space<vmem>>, vector<24x256xf32>
    %48 = tpu.concatenate %47, %45 in 0 : vector<24x256xf32>, vector<8x256xf32> -> vector<32x256xf32>
    %c0_21 = arith.constant 0 : index
    %c0_22 = arith.constant 0 : index
    %49 = vector.load %arg8[%c0_21, %c0_22] : memref<24x256xf32, #tpu.memory_space<vmem>>, vector<24x256xf32>
    %50 = tpu.concatenate %49, %46 in 0 : vector<24x256xf32>, vector<8x256xf32> -> vector<32x256xf32>
    %c0_23 = arith.constant 0 : index
    %c0_24 = arith.constant 0 : index
    %51 = vector.load %arg16[%c0_23, %c0_24] : memref<32x256xf32, #tpu.memory_space<vmem>>, vector<32x256xf32>
    tpu.vector_store %arg16[%c0_23, %c0_24], %48 {strides = array<i32>} : memref<32x256xf32, #tpu.memory_space<vmem>>, vector<32x256xf32>,
    %c0_25 = arith.constant 0 : index
    %c0_26 = arith.constant 0 : index
    %52 = vector.load %arg17[%c0_25, %c0_26] : memref<32x256xf32, #tpu.memory_space<vmem>>, vector<32x256xf32>
    tpu.vector_store %arg17[%c0_25, %c0_26], %50 {strides = array<i32>} : memref<32x256xf32, #tpu.memory_space<vmem>>, vector<32x256xf32>,
    %c0_27 = arith.constant 0 : index
    %c0_28 = arith.constant 0 : index
    %53 = vector.load %arg9[%c0_27, %c0_28] : memref<8x32xf32, #tpu.memory_space<vmem>>, vector<8x32xf32>
    %54 = vector.extract_strided_slice %48 {offsets = [0, 0], sizes = [32, 128], strides = [1, 1]} : vector<32x256xf32> to vector<32x128xf32>
    %55 = vector.extract_strided_slice %50 {offsets = [0, 0], sizes = [32, 128], strides = [1, 1]} : vector<32x256xf32> to vector<32x128xf32>
    %cst_29 = arith.constant dense<0.000000e+00> : vector<8x32xf32>
    %56 = tpu.matmul %28, %54, %cst_29 {dimension_numbers = #tpu.dot_dimension_numbers<[1], [1], [0], [0], [0, 0, 1, 0], [], []>} : vector<8x128xf32>, vector<32x128xf32>, vector<8x32xf32> -> vector<8x32xf32>
    %57 = arith.addf %56, %53 : vector<8x32xf32>
    %cst_30 = arith.constant dense<0xFF800000> : vector<8xf32>
    %58 = vector.multi_reduction <maximumf>, %57, %cst_30 [1] : vector<8x32xf32> to vector<8xf32>
    %59 = vector.shape_cast %58 : vector<8xf32> to vector<8x1xf32>
    %60 = vector.broadcast %59 : vector<8x1xf32> to vector<8x32xf32>
    %61 = arith.subf %57, %60 : vector<8x32xf32>
    %62 = math.exp %61 : vector<8x32xf32>
    %cst_31 = arith.constant dense<0.000000e+00> : vector<8xf32>
    %63 = vector.multi_reduction <add>, %62, %cst_31 [1] : vector<8x32xf32> to vector<8xf32>
    %64 = vector.shape_cast %63 : vector<8xf32> to vector<8x1xf32>
    %65 = tpu.reciprocal %64 {approx = true} : vector<8x1xf32> -> vector<8x1xf32>
    %66 = vector.broadcast %65 : vector<8x1xf32> to vector<8x32xf32>
    %67 = arith.mulf %62, %66 : vector<8x32xf32>
    %cst_32 = arith.constant dense<0.000000e+00> : vector<8x128xf32>
    %68 = tpu.matmul %67, %55, %cst_32 {dimension_numbers = #tpu.dot_dimension_numbers<[1], [0], [0], [1], [0, 0, 1, 1], [], []>} : vector<8x32xf32>, vector<32x128xf32>, vector<8x128xf32> -> vector<8x128xf32>
    %69 = vector.extract_strided_slice %48 {offsets = [0, 128], sizes = [32, 128], strides = [1, 1]} : vector<32x256xf32> to vector<32x128xf32>
    %70 = vector.extract_strided_slice %50 {offsets = [0, 128], sizes = [32, 128], strides = [1, 1]} : vector<32x256xf32> to vector<32x128xf32>
    %cst_33 = arith.constant dense<0.000000e+00> : vector<8x32xf32>
    %71 = tpu.matmul %40, %69, %cst_33 {dimension_numbers = #tpu.dot_dimension_numbers<[1], [1], [0], [0], [0, 0, 1, 0], [], []>} : vector<8x128xf32>, vector<32x128xf32>, vector<8x32xf32> -> vector<8x32xf32>
    %72 = arith.addf %71, %53 : vector<8x32xf32>
    %cst_34 = arith.constant dense<0xFF800000> : vector<8xf32>
    %73 = vector.multi_reduction <maximumf>, %72, %cst_34 [1] : vector<8x32xf32> to vector<8xf32>
    %74 = vector.shape_cast %73 : vector<8xf32> to vector<8x1xf32>
    %75 = vector.broadcast %74 : vector<8x1xf32> to vector<8x32xf32>
    %76 = arith.subf %72, %75 : vector<8x32xf32>
    %77 = math.exp %76 : vector<8x32xf32>
    %cst_35 = arith.constant dense<0.000000e+00> : vector<8xf32>
    %78 = vector.multi_reduction <add>, %77, %cst_35 [1] : vector<8x32xf32> to vector<8xf32>
    %79 = vector.shape_cast %78 : vector<8xf32> to vector<8x1xf32>
    %80 = tpu.reciprocal %79 {approx = true} : vector<8x1xf32> -> vector<8x1xf32>
    %81 = vector.broadcast %80 : vector<8x1xf32> to vector<8x32xf32>
    %82 = arith.mulf %77, %81 : vector<8x32xf32>
    %cst_36 = arith.constant dense<0.000000e+00> : vector<8x128xf32>
    %83 = tpu.matmul %82, %70, %cst_36 {dimension_numbers = #tpu.dot_dimension_numbers<[1], [0], [0], [1], [0, 0, 1, 1], [], []>} : vector<8x32xf32>, vector<32x128xf32>, vector<8x128xf32> -> vector<8x128xf32>
    %84 = tpu.concatenate %68, %83 in 1 : vector<8x128xf32>, vector<8x128xf32> -> vector<8x256xf32>
    %c0_37 = arith.constant 0 : index
    %c0_38 = arith.constant 0 : index
    %85 = vector.load %arg10[%c0_37, %c0_38] : memref<256x256xf32, #tpu.memory_space<vmem>>, vector<256x256xf32>
    %cst_39 = arith.constant dense<0.000000e+00> : vector<8x256xf32>
    %86 = tpu.matmul %84, %85, %cst_39 {dimension_numbers = #tpu.dot_dimension_numbers<[1], [0], [0], [1], [0, 0, 1, 1], [], []>} : vector<8x256xf32>, vector<256x256xf32>, vector<8x256xf32> -> vector<8x256xf32>
    %87 = arith.addf %86, %0 : vector<8x256xf32>
    %c0_40 = arith.constant 0 : index
    %c0_41 = arith.constant 0 : index
    %88 = vector.load %arg11[%c0_40, %c0_41] : memref<1x256xf32, #tpu.memory_space<vmem>>, vector<1x256xf32>
    %89 = arith.mulf %87, %87 : vector<8x256xf32>
    %cst_42 = arith.constant dense<0.000000e+00> : vector<8xf32>
    %90 = vector.multi_reduction <add>, %89, %cst_42 [1] : vector<8x256xf32> to vector<8xf32>
    %91 = vector.shape_cast %90 : vector<8xf32> to vector<8x1xf32>
    %cst_43 = arith.constant 2.560000e+02 : f32
    %92 = vector.broadcast %cst_43 : f32 to vector<8x1xf32>
    %93 = arith.divf %91, %92 : vector<8x1xf32>
    %cst_44 = arith.constant 9.99999997E-7 : f32
    %94 = vector.broadcast %cst_44 : f32 to vector<8x1xf32>
    %95 = arith.addf %93, %94 : vector<8x1xf32>
    %96 = math.rsqrt %95 : vector<8x1xf32>
    %97 = vector.broadcast %96 : vector<8x1xf32> to vector<8x256xf32>
    %98 = arith.mulf %87, %97 : vector<8x256xf32>
    %99 = vector.broadcast %88 : vector<1x256xf32> to vector<8x256xf32>
    %100 = arith.mulf %98, %99 : vector<8x256xf32>
    %c0_45 = arith.constant 0 : index
    %c0_46 = arith.constant 0 : index
    %101 = vector.load %arg12[%c0_45, %c0_46] : memref<256x256xf32, #tpu.memory_space<vmem>>, vector<256x256xf32>
    %cst_47 = arith.constant dense<0.000000e+00> : vector<8x256xf32>
    %102 = tpu.matmul %100, %101, %cst_47 {dimension_numbers = #tpu.dot_dimension_numbers<[1], [0], [0], [1], [0, 0, 1, 1], [], []>} : vector<8x256xf32>, vector<256x256xf32>, vector<8x256xf32> -> vector<8x256xf32>
    %c0_48 = arith.constant 0 : index
    %c0_49 = arith.constant 0 : index
    %103 = vector.load %arg13[%c0_48, %c0_49] : memref<256x256xf32, #tpu.memory_space<vmem>>, vector<256x256xf32>
    %cst_50 = arith.constant dense<0.000000e+00> : vector<8x256xf32>
    %104 = tpu.matmul %100, %103, %cst_50 {dimension_numbers = #tpu.dot_dimension_numbers<[1], [0], [0], [1], [0, 0, 1, 1], [], []>} : vector<8x256xf32>, vector<256x256xf32>, vector<8x256xf32> -> vector<8x256xf32>
    %cst_51 = arith.constant 0.000000e+00 : f32
    %105 = vector.broadcast %cst_51 : f32 to vector<8x256xf32>
    %106 = arith.subf %105, %104 : vector<8x256xf32>
    %107 = math.exp %106 : vector<8x256xf32>
    %cst_52 = arith.constant 1.000000e+00 : f32
    %108 = vector.broadcast %cst_52 : f32 to vector<8x256xf32>
    %109 = arith.addf %108, %107 : vector<8x256xf32>
    %110 = tpu.reciprocal %109 {approx = true} : vector<8x256xf32> -> vector<8x256xf32>
    %111 = arith.mulf %104, %110 : vector<8x256xf32>
    %112 = arith.mulf %102, %111 : vector<8x256xf32>
    %c0_53 = arith.constant 0 : index
    %c0_54 = arith.constant 0 : index
    %113 = vector.load %arg14[%c0_53, %c0_54] : memref<256x256xf32, #tpu.memory_space<vmem>>, vector<256x256xf32>
    %cst_55 = arith.constant dense<0.000000e+00> : vector<8x256xf32>
    %114 = tpu.matmul %112, %113, %cst_55 {dimension_numbers = #tpu.dot_dimension_numbers<[1], [0], [0], [1], [0, 0, 1, 1], [], []>} : vector<8x256xf32>, vector<256x256xf32>, vector<8x256xf32> -> vector<8x256xf32>
    %115 = arith.addf %87, %114 : vector<8x256xf32>
    %c0_56 = arith.constant 0 : index
    %c0_57 = arith.constant 0 : index
    %116 = vector.load %arg15[%c0_56, %c0_57] : memref<8x256xf32, #tpu.memory_space<vmem>>, vector<8x256xf32>
    tpu.vector_store %arg15[%c0_56, %c0_57], %115 {strides = array<i32>} : memref<8x256xf32, #tpu.memory_space<vmem>>, vector<8x256xf32>,
    return
  }
  func.func @transform_0(%arg0: i32) -> (i32, i32) {
    %c0_i32 = arith.constant 0 : i32
    %c0_i32_0 = arith.constant 0 : i32
    %c0_i32_1 = arith.constant 0 : i32
    return %c0_i32, %c0_i32_0 : i32, i32
  }
  func.func @transform_1(%arg0: i32) -> (i32, i32) {
    %c0_i32 = arith.constant 0 : i32
    %c0_i32_0 = arith.constant 0 : i32
    %c0_i32_1 = arith.constant 0 : i32
    return %c0_i32, %c0_i32_0 : i32, i32
  }
  func.func @transform_2(%arg0: i32) -> (i32, i32) {
    %c0_i32 = arith.constant 0 : i32
    %c0_i32_0 = arith.constant 0 : i32
    %c0_i32_1 = arith.constant 0 : i32
    return %c0_i32, %c0_i32_0 : i32, i32
  }
  func.func @transform_3(%arg0: i32) -> (i32, i32) {
    %c0_i32 = arith.constant 0 : i32
    %c0_i32_0 = arith.constant 0 : i32
    %c0_i32_1 = arith.constant 0 : i32
    return %c0_i32, %c0_i32_0 : i32, i32
  }
  func.func @transform_4(%arg0: i32) -> (i32, i32) {
    %c0_i32 = arith.constant 0 : i32
    %c0_i32_0 = arith.constant 0 : i32
    %c0_i32_1 = arith.constant 0 : i32
    return %c0_i32, %c0_i32_0 : i32, i32
  }
  func.func @transform_5(%arg0: i32) -> (i32, i32) {
    %c0_i32 = arith.constant 0 : i32
    %c0_i32_0 = arith.constant 0 : i32
    %c0_i32_1 = arith.constant 0 : i32
    return %c0_i32, %c0_i32_0 : i32, i32
  }
  func.func @transform_6(%arg0: i32) -> (i32, i32) {
    %c0_i32 = arith.constant 0 : i32
    %c0_i32_0 = arith.constant 0 : i32
    %c0_i32_1 = arith.constant 0 : i32
    return %c0_i32, %c0_i32_0 : i32, i32
  }
  func.func @transform_7(%arg0: i32) -> (i32, i32) {
    %c0_i32 = arith.constant 0 : i32
    %c0_i32_0 = arith.constant 0 : i32
    %c0_i32_1 = arith.constant 0 : i32
    return %c0_i32, %c0_i32_0 : i32, i32
  }
  func.func @transform_8(%arg0: i32) -> (i32, i32) {
    %c0_i32 = arith.constant 0 : i32
    %c0_i32_0 = arith.constant 0 : i32
    %c0_i32_1 = arith.constant 0 : i32
    return %c0_i32, %c0_i32_0 : i32, i32
  }
  func.func @transform_9(%arg0: i32) -> (i32, i32) {
    %c0_i32 = arith.constant 0 : i32
    %c0_i32_0 = arith.constant 0 : i32
    %c0_i32_1 = arith.constant 0 : i32
    return %c0_i32, %c0_i32_0 : i32, i32
  }
  func.func @transform_10(%arg0: i32) -> (i32, i32) {
    %c0_i32 = arith.constant 0 : i32
    %c0_i32_0 = arith.constant 0 : i32
    %c0_i32_1 = arith.constant 0 : i32
    return %c0_i32, %c0_i32_0 : i32, i32
  }
  func.func @transform_11(%arg0: i32) -> (i32, i32) {
    %c0_i32 = arith.constant 0 : i32
    %c0_i32_0 = arith.constant 0 : i32
    %c0_i32_1 = arith.constant 0 : i32
    return %c0_i32, %c0_i32_0 : i32, i32
  }
  func.func @transform_12(%arg0: i32) -> (i32, i32) {
    %c0_i32 = arith.constant 0 : i32
    %c0_i32_0 = arith.constant 0 : i32
    %c0_i32_1 = arith.constant 0 : i32
    return %c0_i32, %c0_i32_0 : i32, i32
  }
  func.func @transform_13(%arg0: i32) -> (i32, i32) {
    %c0_i32 = arith.constant 0 : i32
    %c0_i32_0 = arith.constant 0 : i32
    %c0_i32_1 = arith.constant 0 : i32
    return %c0_i32, %c0_i32_0 : i32, i32
  }
  func.func @transform_14(%arg0: i32) -> (i32, i32) {
    %c0_i32 = arith.constant 0 : i32
    %c0_i32_0 = arith.constant 0 : i32
    %c0_i32_1 = arith.constant 0 : i32
    return %c0_i32, %c0_i32_0 : i32, i32
  }
  func.func @transform_15(%arg0: i32) -> (i32, i32) {
    %c0_i32 = arith.constant 0 : i32
    %c0_i32_0 = arith.constant 0 : i32
    %c0_i32_1 = arith.constant 0 : i32
    return %c0_i32, %c0_i32_0 : i32, i32
  }
  func.func @transform_16(%arg0: i32) -> (i32, i32) {
    %c0_i32 = arith.constant 0 : i32
    %c0_i32_0 = arith.constant 0 : i32
    %c0_i32_1 = arith.constant 0 : i32
    return %c0_i32, %c0_i32_0 : i32, i32
  }
}

</mosaic_0001>

<llo_original>
// kernel: qwen_block_cache_forward.1
$region0: #{qwen_block_cache_forward.1}
  #allocation0 [shape = 'u32[]', space=smem, size = 0x4, offset = 0x4, fixed_abs, tag = 'smem constant byte address 0x4 - core index']
  #allocation1 [shape = 'u32[72,128]{1,0:T(1,128)}', space=vmem, size = 0x9000, scoped, tag = 'internal scratch']
  %s0 = inlined_call_operand.vmem [shape: f32[8,256], index: 0, kind: input, shape index: {}]
  %s1 = inlined_call_operand.vmem [shape: f32[8,128], index: 1, kind: input, shape index: {}]
  %s2 = inlined_call_operand.vmem [shape: f32[8,128], index: 2, kind: input, shape index: {}]
  %s3 = inlined_call_operand.vmem [shape: f32[1,256], index: 3, kind: input, shape index: {}]
  %s4 = inlined_call_operand.hbm [shape: f32[256,768], index: 4, kind: input, shape index: {}]
  %s5 = inlined_call_operand.vmem [shape: f32[1,768], index: 5, kind: input, shape index: {}]
  %s6 = inlined_call_operand.vmem [shape: f32[24,256], index: 6, kind: input, shape index: {}]
  %s7 = inlined_call_operand.vmem [shape: f32[24,256], index: 7, kind: input, shape index: {}]
  %s8 = inlined_call_operand.vmem [shape: f32[8,32], index: 8, kind: input, shape index: {}]
  %s9 = inlined_call_operand.hbm [shape: f32[256,256], index: 9, kind: input, shape index: {}]
  %s10 = inlined_call_operand.vmem [shape: f32[1,256], index: 10, kind: input, shape index: {}]
  %s11 = inlined_call_operand.hbm [shape: f32[256,256], index: 11, kind: input, shape index: {}]
  %s12 = inlined_call_operand.hbm [shape: f32[256,256], index: 12, kind: input, shape index: {}]
  %s13 = inlined_call_operand.hbm [shape: f32[256,256], index: 13, kind: input, shape index: {}]
  %s14 = inlined_call_operand.hbm [shape: f32[8,256], index: 14, kind: output, shape index: {0}]
  %s15 = inlined_call_operand.vmem [shape: f32[32,256], index: 15, kind: output, shape index: {1}]
  %s16 = inlined_call_operand.vmem [shape: f32[32,256], index: 16, kind: output, shape index: {2}]
  %17 = xla_tuple %s14, %s15, %s16
  %s18 = sld [smem:[#allocation0]]
  $region102: #{qwen_block_cache_forward.1} parent=0
    _
  %s20 = ssub.s32 1, %s18
  %s21 = scalar_select 0, %s20, %s18
  $region1: #{qwen_block_cache_forward.1} parent=0
    #allocation2 [shape = 'u8[786432]{0}', space=vmem, size = 0xc0000, scoped, tag = 'input window, operand 4, single buffered']
    #allocation3 [shape = 's32[1]{0}', space=sflag, size = 0x4, scoped, tag = 'scoped memory for qwen_block_cache_forward.1']
    #allocation4 [shape = 's32[1]{0}', space=sflag, size = 0x4, scoped, tag = 'scoped memory for qwen_block_cache_forward.1']
    #allocation5 [shape = 'u8[262144]{0}', space=vmem, size = 0x40000, scoped, tag = 'input window, operand 9, single buffered']
    #allocation6 [shape = 's32[1]{0}', space=sflag, size = 0x4, scoped, tag = 'scoped memory for qwen_block_cache_forward.1']
    #allocation7 [shape = 'u8[262144]{0}', space=vmem, size = 0x40000, scoped, tag = 'input window, operand 11, single buffered']
    #allocation8 [shape = 'u8[262144]{0}', space=vmem, size = 0x40000, scoped, tag = 'input window, operand 12, single buffered']
    #allocation9 [shape = 's32[1]{0}', space=sflag, size = 0x4, scoped, tag = 'scoped memory for qwen_block_cache_forward.1']
    #allocation10 [shape = 'u8[262144]{0}', space=vmem, size = 0x40000, scoped, tag = 'input window, operand 13, single buffered']
    #allocation11 [shape = 'u8[8192]{0}', space=vmem, size = 0x2000, scoped, tag = 'output window, operand 0, single buffered']
    %22 = vsyncpa [#allocation3], 0
    %23 = vsyncpa [#allocation6], 0
    %24 = vsyncpa [#allocation9], 0
    %25 = vsyncpa [#allocation4], 0
    // Predicated region
    $region2: #{qwen_block_cache_forward.1} parent=1 // pred_check
      _
    $region3: #{qwen_block_cache_forward.1} parent=1 // pred_check_branch
      %27 = sbr.rel (0) target = $region5
    $region4: #{qwen_block_cache_forward.1} parent=1 // pred_region
      _
    $region5: #{qwen_block_cache_forward.1} parent=1 // pred_fallthru
      _
    // Predicated region
    $region6: #{qwen_block_cache_forward.1} parent=1 // pred_check
      _
    $region7: #{qwen_block_cache_forward.1} parent=1 // pred_check_branch
      %29 = sbr.rel (0) target = $region9
    $region8: #{qwen_block_cache_forward.1} parent=1 // pred_region
      _
    $region9: #{qwen_block_cache_forward.1} parent=1 // pred_fallthru
      _
    // Predicated region
    $region10: #{qwen_block_cache_forward.1} parent=1 // pred_check
      _
    $region11: #{qwen_block_cache_forward.1} parent=1 // pred_check_branch
      %31 = sbr.rel (0) target = $region13
    $region12: #{qwen_block_cache_forward.1} parent=1 // pred_region
      _
    $region13: #{qwen_block_cache_forward.1} parent=1 // pred_fallthru
      _
    // Predicated region
    $region14: #{qwen_block_cache_forward.1} parent=1 // pred_check
      _
    $region15: #{qwen_block_cache_forward.1} parent=1 // pred_check_branch
      %33 = sbr.rel (0) target = $region17
    $region16: #{qwen_block_cache_forward.1} parent=1 // pred_region
      _
    $region17: #{qwen_block_cache_forward.1} parent=1 // pred_fallthru
      _
    // Predicated region
    $region18: #{qwen_block_cache_forward.1} parent=1 // pred_check
      _
    $region19: #{qwen_block_cache_forward.1} parent=1 // pred_check_branch
      %35 = sbr.rel (0) target = $region21
    $region20: #{qwen_block_cache_forward.1} parent=1 // pred_region
      %37 = vsyncadd [#allocation3], 0
      %s38 = sshll.u32 %s4, 4
      %s39 = int_to_ptr.hbm [resolvable:$true] %s38
      %s40 = sshll.u32 [#allocation2], 4
      %s41 = int_to_ptr.vmem [resolvable:$true] %s40
      %46 = dma.hbm_to_vmem [thread:$0]  %s39, 24576, %s41, [#allocation3], 768, 768, 48
    $region21: #{qwen_block_cache_forward.1} parent=1 // pred_fallthru
      _
    // Predicated region
    $region22: #{qwen_block_cache_forward.1} parent=1 // pred_check
      _
    $region23: #{qwen_block_cache_forward.1} parent=1 // pred_check_branch
      %48 = sbr.rel (0) target = $region25
    $region24: #{qwen_block_cache_forward.1} parent=1 // pred_region
      _
    $region25: #{qwen_block_cache_forward.1} parent=1 // pred_fallthru
      _
    // Predicated region
    $region26: #{qwen_block_cache_forward.1} parent=1 // pred_check
      _
    $region27: #{qwen_block_cache_forward.1} parent=1 // pred_check_branch
      %50 = sbr.rel (0) target = $region29
    $region28: #{qwen_block_cache_forward.1} parent=1 // pred_region
      _
    $region29: #{qwen_block_cache_forward.1} parent=1 // pred_fallthru
      _
    // Predicated region
    $region30: #{qwen_block_cache_forward.1} parent=1 // pred_check
      _
    $region31: #{qwen_block_cache_forward.1} parent=1 // pred_check_branch
      %52 = sbr.rel (0) target = $region33
    $region32: #{qwen_block_cache_forward.1} parent=1 // pred_region
      _
    $region33: #{qwen_block_cache_forward.1} parent=1 // pred_fallthru
      _
    // Predicated region
    $region34: #{qwen_block_cache_forward.1} parent=1 // pred_check
      _
    $region35: #{qwen_block_cache_forward.1} parent=1 // pred_check_branch
      %54 = sbr.rel (0) target = $region37
    $region36: #{qwen_block_cache_forward.1} parent=1 // pred_region
      _
    $region37: #{qwen_block_cache_forward.1} parent=1 // pred_fallthru
      _
    // Predicated region
    $region38: #{qwen_block_cache_forward.1} parent=1 // pred_check
      _
    $region39: #{qwen_block_cache_forward.1} parent=1 // pred_check_branch
      %56 = sbr.rel (0) target = $region41
    $region40: #{qwen_block_cache_forward.1} parent=1 // pred_region
      %58 = vsyncadd [#allocation6], 0
      %s59 = sshll.u32 %s9, 4
      %s60 = int_to_ptr.hbm [resolvable:$true] %s59
      %s61 = sshll.u32 [#allocation5], 4
      %s62 = int_to_ptr.vmem [resolvable:$true] %s61
      %67 = dma.hbm_to_vmem [thread:$0]  %s60, 8192, %s62, [#allocation6], 256, 256, 16
    $region41: #{qwen_block_cache_forward.1} parent=1 // pred_fallthru
      _
    // Predicated region
    $region42: #{qwen_block_cache_forward.1} parent=1 // pred_check
      _
    $region43: #{qwen_block_cache_forward.1} parent=1 // pred_check_branch
      %69 = sbr.rel (0) target = $region45
    $region44: #{qwen_block_cache_forward.1} parent=1 // pred_region
      _
    $region45: #{qwen_block_cache_forward.1} parent=1 // pred_fallthru
      _
    // Predicated region
    $region46: #{qwen_block_cache_forward.1} parent=1 // pred_check
      _
    $region47: #{qwen_block_cache_forward.1} parent=1 // pred_check_branch
      %71 = sbr.rel (0) target = $region49
    $region48: #{qwen_block_cache_forward.1} parent=1 // pred_region
      %73 = vsyncadd [#allocation6], 0
      %s74 = sshll.u32 %s11, 4
      %s75 = int_to_ptr.hbm [resolvable:$true] %s74
      %s76 = sshll.u32 [#allocation7], 4
      %s77 = int_to_ptr.vmem [resolvable:$true] %s76
      %82 = dma.hbm_to_vmem [thread:$0]  %s75, 8192, %s77, [#allocation6], 256, 256, 16
    $region49: #{qwen_block_cache_forward.1} parent=1 // pred_fallthru
      _
    // Predicated region
    $region50: #{qwen_block_cache_forward.1} parent=1 // pred_check
      _
    $region51: #{qwen_block_cache_forward.1} parent=1 // pred_check_branch
      %84 = sbr.rel (0) target = $region53
    $region52: #{qwen_block_cache_forward.1} parent=1 // pred_region
      %86 = vsyncadd [#allocation9], 0
      %s87 = sshll.u32 %s12, 4
      %s88 = int_to_ptr.hbm [resolvable:$true] %s87
      %s89 = sshll.u32 [#allocation8], 4
      %s90 = int_to_ptr.vmem [resolvable:$true] %s89
      %95 = dma.hbm_to_vmem [thread:$0]  %s88, 8192, %s90, [#allocation9], 256, 256, 16
    $region53: #{qwen_block_cache_forward.1} parent=1 // pred_fallthru
      _
    // Predicated region
    $region54: #{qwen_block_cache_forward.1} parent=1 // pred_check
      _
    $region55: #{qwen_block_cache_forward.1} parent=1 // pred_check_branch
      %97 = sbr.rel (0) target = $region57
    $region56: #{qwen_block_cache_forward.1} parent=1 // pred_region
      %99 = vsyncadd [#allocation9], 0
      %s100 = sshll.u32 %s13, 4
      %s101 = int_to_ptr.hbm [resolvable:$true] %s100
      %s102 = sshll.u32 [#allocation10], 4
      %s103 = int_to_ptr.vmem [resolvable:$true] %s102
      %108 = dma.hbm_to_vmem [thread:$0]  %s101, 8192, %s103, [#allocation9], 256, 256, 16
    $region57: #{qwen_block_cache_forward.1} parent=1 // pred_fallthru
      _
    // Predicated region
    $region58: #{qwen_block_cache_forward.1} parent=1 // pred_check
      _
    $region59: #{qwen_block_cache_forward.1} parent=1 // pred_check_branch
      %110 = sbr.rel (0) target = $region61
    $region60: #{qwen_block_cache_forward.1} parent=1 // pred_region
      %112 = dma.done [#allocation3], 24576
    $region61: #{qwen_block_cache_forward.1} parent=1 // pred_fallthru
      _
    // Predicated region
    $region62: #{qwen_block_cache_forward.1} parent=1 // pred_check
      _
    $region63: #{qwen_block_cache_forward.1} parent=1 // pred_check_branch
      %114 = sbr.rel (0) target = $region65
    $region64: #{qwen_block_cache_forward.1} parent=1 // pred_region
      %116 = dma.done [#allocation6], 8192
    $region65: #{qwen_block_cache_forward.1} parent=1 // pred_fallthru
      _
    // Predicated region
    $region66: #{qwen_block_cache_forward.1} parent=1 // pred_check
      _
    $region67: #{qwen_block_cache_forward.1} parent=1 // pred_check_branch
      %118 = sbr.rel (0) target = $region69
    $region68: #{qwen_block_cache_forward.1} parent=1 // pred_region
      %120 = dma.done [#allocation6], 8192
    $region69: #{qwen_block_cache_forward.1} parent=1 // pred_fallthru
      _
    // Predicated region
    $region70: #{qwen_block_cache_forward.1} parent=1 // pred_check
      _
    $region71: #{qwen_block_cache_forward.1} parent=1 // pred_check_branch
      %122 = sbr.rel (0) target = $region73
    $region72: #{qwen_block_cache_forward.1} parent=1 // pred_region
      %124 = dma.done [#allocation9], 8192
    $region73: #{qwen_block_cache_forward.1} parent=1 // pred_fallthru
      _
    // Predicated region
    $region74: #{qwen_block_cache_forward.1} parent=1 // pred_check
      _
    $region75: #{qwen_block_cache_forward.1} parent=1 // pred_check_branch
      %126 = sbr.rel (0) target = $region77
    $region76: #{qwen_block_cache_forward.1} parent=1 // pred_region
      %128 = dma.done [#allocation9], 8192
    $region77: #{qwen_block_cache_forward.1} parent=1 // pred_fallthru
      _
    %v129 = vld [vmem:[%s0] sm:$0xff]
    %v130 = vld [vmem:[%s0 + $0x8] sm:$0xff]
    %v131 = vld [vmem:[%s3] sm:$0x3]
    %v132 = vmul.f32 %v129, %v129
    %v133 = vmul.f32 %v130, %v130
    %v134 = vadd.f32 %v132, %v133
    %135 = vadd.xlane.f32.xlu0 %v134
    %v136 = vpop.xlane.xlu0 %135
    %v137 = vrcp.pop 256.0
    %v138 = vmul.f32 256.0, %v137
    %v139 = vsub.f32 1.0, %v138
    %v140 = vmul.f32 %v137, %v139
    %v141 = vadd.f32 %v137, %v140
    %vm142 = vweird.f32 %v137
    %v143 = vsel %vm142, %v137, %v141
    %v144 = vmul.f32 %v136, %v143
    %v145 = vadd.f32 %v144, 1e-06
    %v146 = vrsqrt.pop %v145
    %v147 = vmul.f32 %v146, %v145
    %v148 = vmul.f32 %v147, %v146
    %v149 = vmul.f32 0.5, %v148
    %v150 = vsub.f32 1.5, %v149
    %v151 = vmul.f32 %v146, %v150
    %vm152 = vweird.f32 %v145
    %vm153 = vweird.f32 %v146
    %vm154 = vmor %vm152, %vm153
    %v155 = vsel %vm154, %v146, %v151
    %v156 = vmul.f32 %v129, %v155
    %v157 = vmul.f32 %v130, %v155
    %v159 = vperm.slane %v131, 0
    %v160 = vperm.slane %v131, 1
    %v163 = vmul.f32 %v156, %v159
    %v164 = vmul.f32 %v157, %v160
    %v165 = vld [vmem:[#allocation2] sm:$0xff]
    %v166 = vld [vmem:[#allocation2 + $0x8] sm:$0xff]
    %v167 = vld [vmem:[#allocation2 + $0x10] sm:$0xff]
    %v168 = vld [vmem:[#allocation2 + $0x18] sm:$0xff]
    %v169 = vld [vmem:[#allocation2 + $0x20] sm:$0xff]
    %v170 = vld [vmem:[#allocation2 + $0x28] sm:$0xff]
    %v171 = vld [vmem:[#allocation2 + $0x30] sm:$0xff]
    %v172 = vld [vmem:[#allocation2 + $0x38] sm:$0xff]
    %v173 = vld [vmem:[#allocation2 + $0x40] sm:$0xff]
    %v174 = vld [vmem:[#allocation2 + $0x48] sm:$0xff]
    %v175 = vld [vmem:[#allocation2 + $0x50] sm:$0xff]
    %v176 = vld [vmem:[#allocation2 + $0x58] sm:$0xff]
    %v177 = vld [vmem:[#allocation2 + $0x60] sm:$0xff]
    %v178 = vld [vmem:[#allocation2 + $0x68] sm:$0xff]
    %v179 = vld [vmem:[#allocation2 + $0x70] sm:$0xff]
    %v180 = vld [vmem:[#allocation2 + $0x78] sm:$0xff]
    %v181 = vld [vmem:[#allocation2 + $0x80] sm:$0xff]
    %v182 = vld [vmem:[#allocation2 + $0x88] sm:$0xff]
    %v183 = vld [vmem:[#allocation2 + $0x90] sm:$0xff]
    %v184 = vld [vmem:[#allocation2 + $0x98] sm:$0xff]
    %v185 = vld [vmem:[#allocation2 + $0xa0] sm:$0xff]
    %v186 = vld [vmem:[#allocation2 + $0xa8] sm:$0xff]
    %v187 = vld [vmem:[#allocation2 + $0xb0] sm:$0xff]
    %v188 = vld [vmem:[#allocation2 + $0xb8] sm:$0xff]
    %v189 = vld [vmem:[#allocation2 + $0xc0] sm:$0xff]
    %v190 = vld [vmem:[#allocation2 + $0xc8] sm:$0xff]
    %v191 = vld [vmem:[#allocation2 + $0xd0] sm:$0xff]
    %v192 = vld [vmem:[#allocation2 + $0xd8] sm:$0xff]
    %v193 = vld [vmem:[#allocation2 + $0xe0] sm:$0xff]
    %v194 = vld [vmem:[#allocation2 + $0xe8] sm:$0xff]
    %v195 = vld [vmem:[#allocation2 + $0xf0] sm:$0xff]
    %v196 = vld [vmem:[#allocation2 + $0xf8] sm:$0xff]
    %v197 = vld [vmem:[#allocation2 + $0x100] sm:$0xff]
    %v198 = vld [vmem:[#allocation2 + $0x108] sm:$0xff]
    %v199 = vld [vmem:[#allocation2 + $0x110] sm:$0xff]
    %v200 = vld [vmem:[#allocation2 + $0x118] sm:$0xff]
    %v201 = vld [vmem:[#allocation2 + $0x120] sm:$0xff]
    %v202 = vld [vmem:[#allocation2 + $0x128] sm:$0xff]
    %v203 = vld [vmem:[#allocation2 + $0x130] sm:$0xff]
    %v204 = vld [vmem:[#allocation2 + $0x138] sm:$0xff]
    %v205 = vld [vmem:[#allocation2 + $0x140] sm:$0xff]
    %v206 = vld [vmem:[#allocation2 + $0x148] sm:$0xff]
    %v207 = vld [vmem:[#allocation2 + $0x150] sm:$0xff]
    %v208 = vld [vmem:[#allocation2 + $0x158] sm:$0xff]
    %v209 = vld [vmem:[#allocation2 + $0x160] sm:$0xff]
    %v210 = vld [vmem:[#allocation2 + $0x168] sm:$0xff]
    %v211 = vld [vmem:[#allocation2 + $0x170] sm:$0xff]
    %v212 = vld [vmem:[#allocation2 + $0x178] sm:$0xff]
    %v213 = vld [vmem:[#allocation2 + $0x180] sm:$0xff]
    %v214 = vld [vmem:[#allocation2 + $0x188] sm:$0xff]
    %v215 = vld [vmem:[#allocation2 + $0x190] sm:$0xff]
    %v216 = vld [vmem:[#allocation2 + $0x198] sm:$0xff]
    %v217 = vld [vmem:[#allocation2 + $0x1a0] sm:$0xff]
    %v218 = vld [vmem:[#allocation2 + $0x1a8] sm:$0xff]
    %v219 = vld [vmem:[#allocation2 + $0x1b0] sm:$0xff]
    %v220 = vld [vmem:[#allocation2 + $0x1b8] sm:$0xff]
    %v221 = vld [vmem:[#allocation2 + $0x1c0] sm:$0xff]
    %v222 = vld [vmem:[#allocation2 + $0x1c8] sm:$0xff]
    %v223 = vld [vmem:[#allocation2 + $0x1d0] sm:$0xff]
    %v224 = vld [vmem:[#allocation2 + $0x1d8] sm:$0xff]
    %v225 = vld [vmem:[#allocation2 + $0x1e0] sm:$0xff]
    %v226 = vld [vmem:[#allocation2 + $0x1e8] sm:$0xff]
    %v227 = vld [vmem:[#allocation2 + $0x1f0] sm:$0xff]
    %v228 = vld [vmem:[#allocation2 + $0x1f8] sm:$0xff]
    %v229 = vld [vmem:[#allocation2 + $0x200] sm:$0xff]
    %v230 = vld [vmem:[#allocation2 + $0x208] sm:$0xff]
    %v231 = vld [vmem:[#allocation2 + $0x210] sm:$0xff]
    %v232 = vld [vmem:[#allocation2 + $0x218] sm:$0xff]
    %v233 = vld [vmem:[#allocation2 + $0x220] sm:$0xff]
    %v234 = vld [vmem:[#allocation2 + $0x228] sm:$0xff]
    %v235 = vld [vmem:[#allocation2 + $0x230] sm:$0xff]
    %v236 = vld [vmem:[#allocation2 + $0x238] sm:$0xff]
    %v237 = vld [vmem:[#allocation2 + $0x240] sm:$0xff]
    %v238 = vld [vmem:[#allocation2 + $0x248] sm:$0xff]
    %v239 = vld [vmem:[#allocation2 + $0x250] sm:$0xff]
    %v240 = vld [vmem:[#allocation2 + $0x258] sm:$0xff]
    %v241 = vld [vmem:[#allocation2 + $0x260] sm:$0xff]
    %v242 = vld [vmem:[#allocation2 + $0x268] sm:$0xff]
    %v243 = vld [vmem:[#allocation2 + $0x270] sm:$0xff]
    %v244 = vld [vmem:[#allocation2 + $0x278] sm:$0xff]
    %v245 = vld [vmem:[#allocation2 + $0x280] sm:$0xff]
    %v246 = vld [vmem:[#allocation2 + $0x288] sm:$0xff]
    %v247 = vld [vmem:[#allocation2 + $0x290] sm:$0xff]
    %v248 = vld [vmem:[#allocation2 + $0x298] sm:$0xff]
    %v249 = vld [vmem:[#allocation2 + $0x2a0] sm:$0xff]
    %v250 = vld [vmem:[#allocation2 + $0x2a8] sm:$0xff]
    %v251 = vld [vmem:[#allocation2 + $0x2b0] sm:$0xff]
    %v252 = vld [vmem:[#allocation2 + $0x2b8] sm:$0xff]
    %v253 = vld [vmem:[#allocation2 + $0x2c0] sm:$0xff]
    %v254 = vld [vmem:[#allocation2 + $0x2c8] sm:$0xff]
    %v255 = vld [vmem:[#allocation2 + $0x2d0] sm:$0xff]
    %v256 = vld [vmem:[#allocation2 + $0x2d8] sm:$0xff]
    %v257 = vld [vmem:[#allocation2 + $0x2e0] sm:$0xff]
    %v258 = vld [vmem:[#allocation2 + $0x2e8] sm:$0xff]
    %v259 = vld [vmem:[#allocation2 + $0x2f0] sm:$0xff]
    %v260 = vld [vmem:[#allocation2 + $0x2f8] sm:$0xff]
    %v261 = vld [vmem:[#allocation2 + $0x300] sm:$0xff]
    %v262 = vld [vmem:[#allocation2 + $0x308] sm:$0xff]
    %v263 = vld [vmem:[#allocation2 + $0x310] sm:$0xff]
    %v264 = vld [vmem:[#allocation2 + $0x318] sm:$0xff]
    %v265 = vld [vmem:[#allocation2 + $0x320] sm:$0xff]
    %v266 = vld [vmem:[#allocation2 + $0x328] sm:$0xff]
    %v267 = vld [vmem:[#allocation2 + $0x330] sm:$0xff]
    %v268 = vld [vmem:[#allocation2 + $0x338] sm:$0xff]
    %v269 = vld [vmem:[#allocation2 + $0x340] sm:$0xff]
    %v270 = vld [vmem:[#allocation2 + $0x348] sm:$0xff]
    %v271 = vld [vmem:[#allocation2 + $0x350] sm:$0xff]
    %v272 = vld [vmem:[#allocation2 + $0x358] sm:$0xff]
    %v273 = vld [vmem:[#allocation2 + $0x360] sm:$0xff]
    %v274 = vld [vmem:[#allocation2 + $0x368] sm:$0xff]
    %v275 = vld [vmem:[#allocation2 + $0x370] sm:$0xff]
    %v276 = vld [vmem:[#allocation2 + $0x378] sm:$0xff]
    %v277 = vld [vmem:[#allocation2 + $0x380] sm:$0xff]
    %v278 = vld [vmem:[#allocation2 + $0x388] sm:$0xff]
    %v279 = vld [vmem:[#allocation2 + $0x390] sm:$0xff]
    %v280 = vld [vmem:[#allocation2 + $0x398] sm:$0xff]
    %v281 = vld [vmem:[#allocation2 + $0x3a0] sm:$0xff]
    %v282 = vld [vmem:[#allocation2 + $0x3a8] sm:$0xff]
    %v283 = vld [vmem:[#allocation2 + $0x3b0] sm:$0xff]
    %v284 = vld [vmem:[#allocation2 + $0x3b8] sm:$0xff]
    %v285 = vld [vmem:[#allocation2 + $0x3c0] sm:$0xff]
    %v286 = vld [vmem:[#allocation2 + $0x3c8] sm:$0xff]
    %v287 = vld [vmem:[#allocation2 + $0x3d0] sm:$0xff]
    %v288 = vld [vmem:[#allocation2 + $0x3d8] sm:$0xff]
    %v289 = vld [vmem:[#allocation2 + $0x3e0] sm:$0xff]
    %v290 = vld [vmem:[#allocation2 + $0x3e8] sm:$0xff]
    %v291 = vld [vmem:[#allocation2 + $0x3f0] sm:$0xff]
    %v292 = vld [vmem:[#allocation2 + $0x3f8] sm:$0xff]
    %v293 = vld [vmem:[#allocation2 + $0x400] sm:$0xff]
    %v294 = vld [vmem:[#allocation2 + $0x408] sm:$0xff]
    %v295 = vld [vmem:[#allocation2 + $0x410] sm:$0xff]
    %v296 = vld [vmem:[#allocation2 + $0x418] sm:$0xff]
    %v297 = vld [vmem:[#allocation2 + $0x420] sm:$0xff]
    %v298 = vld [vmem:[#allocation2 + $0x428] sm:$0xff]
    %v299 = vld [vmem:[#allocation2 + $0x430] sm:$0xff]
    %v300 = vld [vmem:[#allocation2 + $0x438] sm:$0xff]
    %v301 = vld [vmem:[#allocation2 + $0x440] sm:$0xff]
    %v302 = vld [vmem:[#allocation2 + $0x448] sm:$0xff]
    %v303 = vld [vmem:[#allocation2 + $0x450] sm:$0xff]
    %v304 = vld [vmem:[#allocation2 + $0x458] sm:$0xff]
    %v305 = vld [vmem:[#allocation2 + $0x460] sm:$0xff]
    %v306 = vld [vmem:[#allocation2 + $0x468] sm:$0xff]
    %v307 = vld [vmem:[#allocation2 + $0x470] sm:$0xff]
    %v308 = vld [vmem:[#allocation2 + $0x478] sm:$0xff]
    %v309 = vld [vmem:[#allocation2 + $0x480] sm:$0xff]
    %v310 = vld [vmem:[#allocation2 + $0x488] sm:$0xff]
    %v311 = vld [vmem:[#allocation2 + $0x490] sm:$0xff]
    %v312 = vld [vmem:[#allocation2 + $0x498] sm:$0xff]
    %v313 = vld [vmem:[#allocation2 + $0x4a0] sm:$0xff]
    %v314 = vld [vmem:[#allocation2 + $0x4a8] sm:$0xff]
    %v315 = vld [vmem:[#allocation2 + $0x4b0] sm:$0xff]
    %v316 = vld [vmem:[#allocation2 + $0x4b8] sm:$0xff]
    %v317 = vld [vmem:[#allocation2 + $0x4c0] sm:$0xff]
    %v318 = vld [vmem:[#allocation2 + $0x4c8] sm:$0xff]
    %v319 = vld [vmem:[#allocation2 + $0x4d0] sm:$0xff]
    %v320 = vld [vmem:[#allocation2 + $0x4d8] sm:$0xff]
    %v321 = vld [vmem:[#allocation2 + $0x4e0] sm:$0xff]
    %v322 = vld [vmem:[#allocation2 + $0x4e8] sm:$0xff]
    %v323 = vld [vmem:[#allocation2 + $0x4f0] sm:$0xff]
    %v324 = vld [vmem:[#allocation2 + $0x4f8] sm:$0xff]
    %v325 = vld [vmem:[#allocation2 + $0x500] sm:$0xff]
    %v326 = vld [vmem:[#allocation2 + $0x508] sm:$0xff]
    %v327 = vld [vmem:[#allocation2 + $0x510] sm:$0xff]
    %v328 = vld [vmem:[#allocation2 + $0x518] sm:$0xff]
    %v329 = vld [vmem:[#allocation2 + $0x520] sm:$0xff]
    %v330 = vld [vmem:[#allocation2 + $0x528] sm:$0xff]
    %v331 = vld [vmem:[#allocation2 + $0x530] sm:$0xff]
    %v332 = vld [vmem:[#allocation2 + $0x538] sm:$0xff]
    %v333 = vld [vmem:[#allocation2 + $0x540] sm:$0xff]
    %v334 = vld [vmem:[#allocation2 + $0x548] sm:$0xff]
    %v335 = vld [vmem:[#allocation2 + $0x550] sm:$0xff]
    %v336 = vld [vmem:[#allocation2 + $0x558] sm:$0xff]
    %v337 = vld [vmem:[#allocation2 + $0x560] sm:$0xff]
    %v338 = vld [vmem:[#allocation2 + $0x568] sm:$0xff]
    %v339 = vld [vmem:[#allocation2 + $0x570] sm:$0xff]
    %v340 = vld [vmem:[#allocation2 + $0x578] sm:$0xff]
    %v341 = vld [vmem:[#allocation2 + $0x580] sm:$0xff]
    %v342 = vld [vmem:[#allocation2 + $0x588] sm:$0xff]
    %v343 = vld [vmem:[#allocation2 + $0x590] sm:$0xff]
    %v344 = vld [vmem:[#allocation2 + $0x598] sm:$0xff]
    %v345 = vld [vmem:[#allocation2 + $0x5a0] sm:$0xff]
    %v346 = vld [vmem:[#allocation2 + $0x5a8] sm:$0xff]
    %v347 = vld [vmem:[#allocation2 + $0x5b0] sm:$0xff]
    %v348 = vld [vmem:[#allocation2 + $0x5b8] sm:$0xff]
    %v349 = vld [vmem:[#allocation2 + $0x5c0] sm:$0xff]
    %v350 = vld [vmem:[#allocation2 + $0x5c8] sm:$0xff]
    %v351 = vld [vmem:[#allocation2 + $0x5d0] sm:$0xff]
    %v352 = vld [vmem:[#allocation2 + $0x5d8] sm:$0xff]
    %v353 = vld [vmem:[#allocation2 + $0x5e0] sm:$0xff]
    %v354 = vld [vmem:[#allocation2 + $0x5e8] sm:$0xff]
    %v355 = vld [vmem:[#allocation2 + $0x5f0] sm:$0xff]
    %v356 = vld [vmem:[#allocation2 + $0x5f8] sm:$0xff]
    %v357 = vld [vmem:[%s5] sm:$0x3f]
    %v359 = vperm.slane %v357, 0
    %v360 = vperm.slane %v357, 1
    %v361 = vperm.slane %v357, 2
    %v362 = vperm.slane %v357, 3
    %v363 = vperm.slane %v357, 4
    %v364 = vperm.slane %v357, 5
    %371 = vmatpush.msra.mxu0 %v255
    %372 = vmatpush.msra.mxu0 %v249
    %373 = vmatpush.msra.mxu0 %v243
    %374 = vmatpush.msra.mxu0 %v237
    %375 = vmatpush.msra.mxu0 %v231
    %376 = vmatpush.msra.mxu0 %v225
    %377 = vmatpush.msra.mxu0 %v219
    %378 = vmatpush.msra.mxu0 %v213
    %379 = vmatpush.msra.mxu0 %v207
    %380 = vmatpush.msra.mxu0 %v201
    %381 = vmatpush.msra.mxu0 %v195
    %382 = vmatpush.msra.mxu0 %v189
    %383 = vmatpush.msra.mxu0 %v183
    %384 = vmatpush.msra.mxu0 %v177
    %385 = vmatpush.msra.mxu0 %v171
    %386 = vmatpush.msra.mxu0 %v165
    %387 = vmatmul.f32.gmra.mxu0 %v163
    %v388 = vpop.f32.mrf.mxu0
    %v389 = vadd.f32 %v359, %v388
    %390 = vdwg.mxu0
    %391 = vmatpush.msra.mxu0 %v351
    %392 = vmatpush.msra.mxu0 %v345
    %393 = vmatpush.msra.mxu0 %v339
    %394 = vmatpush.msra.mxu0 %v333
    %395 = vmatpush.msra.mxu0 %v327
    %396 = vmatpush.msra.mxu0 %v321
    %397 = vmatpush.msra.mxu0 %v315
    %398 = vmatpush.msra.mxu0 %v309
    %399 = vmatpush.msra.mxu0 %v303
    %400 = vmatpush.msra.mxu0 %v297
    %401 = vmatpush.msra.mxu0 %v291
    %402 = vmatpush.msra.mxu0 %v285
    %403 = vmatpush.msra.mxu0 %v279
    %404 = vmatpush.msra.mxu0 %v273
    %405 = vmatpush.msra.mxu0 %v267
    %406 = vmatpush.msra.mxu0 %v261
    %407 = vmatmul.f32.gmra.mxu0 %v164
    %v408 = vpop.f32.mrf.mxu0
    %v409 = vadd.f32 %v389, %v408
    %410 = vdwg.mxu0
    %411 = vmatpush.msra.mxu0 %v256
    %412 = vmatpush.msra.mxu0 %v250
    %413 = vmatpush.msra.mxu0 %v244
    %414 = vmatpush.msra.mxu0 %v238
    %415 = vmatpush.msra.mxu0 %v232
    %416 = vmatpush.msra.mxu0 %v226
    %417 = vmatpush.msra.mxu0 %v220
    %418 = vmatpush.msra.mxu0 %v214
    %419 = vmatpush.msra.mxu0 %v208
    %420 = vmatpush.msra.mxu0 %v202
    %421 = vmatpush.msra.mxu0 %v196
    %422 = vmatpush.msra.mxu0 %v190
    %423 = vmatpush.msra.mxu0 %v184
    %424 = vmatpush.msra.mxu0 %v178
    %425 = vmatpush.msra.mxu0 %v172
    %426 = vmatpush.msra.mxu0 %v166
    %427 = vmatmul.f32.gmra.mxu0 %v163
    %v428 = vpop.f32.mrf.mxu0
    %v429 = vadd.f32 %v360, %v428
    %430 = vdwg.mxu0
    %431 = vmatpush.msra.mxu0 %v352
    %432 = vmatpush.msra.mxu0 %v346
    %433 = vmatpush.msra.mxu0 %v340
    %434 = vmatpush.msra.mxu0 %v334
    %435 = vmatpush.msra.mxu0 %v328
    %436 = vmatpush.msra.mxu0 %v322
    %437 = vmatpush.msra.mxu0 %v316
    %438 = vmatpush.msra.mxu0 %v310
    %439 = vmatpush.msra.mxu0 %v304
    %440 = vmatpush.msra.mxu0 %v298
    %441 = vmatpush.msra.mxu0 %v292
    %442 = vmatpush.msra.mxu0 %v286
    %443 = vmatpush.msra.mxu0 %v280
    %444 = vmatpush.msra.mxu0 %v274
    %445 = vmatpush.msra.mxu0 %v268
    %446 = vmatpush.msra.mxu0 %v262
    %447 = vmatmul.f32.gmra.mxu0 %v164
    %v448 = vpop.f32.mrf.mxu0
    %v449 = vadd.f32 %v429, %v448
    %450 = vdwg.mxu0
    %451 = vmatpush.msra.mxu0 %v257
    %452 = vmatpush.msra.mxu0 %v251
    %453 = vmatpush.msra.mxu0 %v245
    %454 = vmatpush.msra.mxu0 %v239
    %455 = vmatpush.msra.mxu0 %v233
    %456 = vmatpush.msra.mxu0 %v227
    %457 = vmatpush.msra.mxu0 %v221
    %458 = vmatpush.msra.mxu0 %v215
    %459 = vmatpush.msra.mxu0 %v209
    %460 = vmatpush.msra.mxu0 %v203
    %461 = vmatpush.msra.mxu0 %v197
    %462 = vmatpush.msra.mxu0 %v191
    %463 = vmatpush.msra.mxu0 %v185
    %464 = vmatpush.msra.mxu0 %v179
    %465 = vmatpush.msra.mxu0 %v173
    %466 = vmatpush.msra.mxu0 %v167
    %467 = vmatmul.f32.gmra.mxu0 %v163
    %v468 = vpop.f32.mrf.mxu0
    %v469 = vadd.f32 %v361, %v468
    %470 = vdwg.mxu0
    %471 = vmatpush.msra.mxu0 %v353
    %472 = vmatpush.msra.mxu0 %v347
    %473 = vmatpush.msra.mxu0 %v341
    %474 = vmatpush.msra.mxu0 %v335
    %475 = vmatpush.msra.mxu0 %v329
    %476 = vmatpush.msra.mxu0 %v323
    %477 = vmatpush.msra.mxu0 %v317
    %478 = vmatpush.msra.mxu0 %v311
    %479 = vmatpush.msra.mxu0 %v305
    %480 = vmatpush.msra.mxu0 %v299
    %481 = vmatpush.msra.mxu0 %v293
    %482 = vmatpush.msra.mxu0 %v287
    %483 = vmatpush.msra.mxu0 %v281
    %484 = vmatpush.msra.mxu0 %v275
    %485 = vmatpush.msra.mxu0 %v269
    %486 = vmatpush.msra.mxu0 %v263
    %487 = vmatmul.f32.gmra.mxu0 %v164
    %v488 = vpop.f32.mrf.mxu0
    %v489 = vadd.f32 %v469, %v488
    %490 = vdwg.mxu0
    %491 = vmatpush.msra.mxu0 %v258
    %492 = vmatpush.msra.mxu0 %v252
    %493 = vmatpush.msra.mxu0 %v246
    %494 = vmatpush.msra.mxu0 %v240
    %495 = vmatpush.msra.mxu0 %v234
    %496 = vmatpush.msra.mxu0 %v228
    %497 = vmatpush.msra.mxu0 %v222
    %498 = vmatpush.msra.mxu0 %v216
    %499 = vmatpush.msra.mxu0 %v210
    %500 = vmatpush.msra.mxu0 %v204
    %501 = vmatpush.msra.mxu0 %v198
    %502 = vmatpush.msra.mxu0 %v192
    %503 = vmatpush.msra.mxu0 %v186
    %504 = vmatpush.msra.mxu0 %v180
    %505 = vmatpush.msra.mxu0 %v174
    %506 = vmatpush.msra.mxu0 %v168
    %507 = vmatmul.f32.gmra.mxu0 %v163
    %v508 = vpop.f32.mrf.mxu0
    %v509 = vadd.f32 %v362, %v508
    %510 = vdwg.mxu0
    %511 = vmatpush.msra.mxu0 %v354
    %512 = vmatpush.msra.mxu0 %v348
    %513 = vmatpush.msra.mxu0 %v342
    %514 = vmatpush.msra.mxu0 %v336
    %515 = vmatpush.msra.mxu0 %v330
    %516 = vmatpush.msra.mxu0 %v324
    %517 = vmatpush.msra.mxu0 %v318
    %518 = vmatpush.msra.mxu0 %v312
    %519 = vmatpush.msra.mxu0 %v306
    %520 = vmatpush.msra.mxu0 %v300
    %521 = vmatpush.msra.mxu0 %v294
    %522 = vmatpush.msra.mxu0 %v288
    %523 = vmatpush.msra.mxu0 %v282
    %524 = vmatpush.msra.mxu0 %v276
    %525 = vmatpush.msra.mxu0 %v270
    %526 = vmatpush.msra.mxu0 %v264
    %527 = vmatmul.f32.gmra.mxu0 %v164
    %v528 = vpop.f32.mrf.mxu0
    %v529 = vadd.f32 %v509, %v528
    %530 = vdwg.mxu0
    %531 = vmatpush.msra.mxu0 %v259
    %532 = vmatpush.msra.mxu0 %v253
    %533 = vmatpush.msra.mxu0 %v247
    %534 = vmatpush.msra.mxu0 %v241
    %535 = vmatpush.msra.mxu0 %v235
    %536 = vmatpush.msra.mxu0 %v229
    %537 = vmatpush.msra.mxu0 %v223
    %538 = vmatpush.msra.mxu0 %v217
    %539 = vmatpush.msra.mxu0 %v211
    %540 = vmatpush.msra.mxu0 %v205
    %541 = vmatpush.msra.mxu0 %v199
    %542 = vmatpush.msra.mxu0 %v193
    %543 = vmatpush.msra.mxu0 %v187
    %544 = vmatpush.msra.mxu0 %v181
    %545 = vmatpush.msra.mxu0 %v175
    %546 = vmatpush.msra.mxu0 %v169
    %547 = vmatmul.f32.gmra.mxu0 %v163
    %v548 = vpop.f32.mrf.mxu0
    %v549 = vadd.f32 %v363, %v548
    %550 = vdwg.mxu0
    %551 = vmatpush.msra.mxu0 %v355
    %552 = vmatpush.msra.mxu0 %v349
    %553 = vmatpush.msra.mxu0 %v343
    %554 = vmatpush.msra.mxu0 %v337
    %555 = vmatpush.msra.mxu0 %v331
    %556 = vmatpush.msra.mxu0 %v325
    %557 = vmatpush.msra.mxu0 %v319
    %558 = vmatpush.msra.mxu0 %v313
    %559 = vmatpush.msra.mxu0 %v307
    %560 = vmatpush.msra.mxu0 %v301
    %561 = vmatpush.msra.mxu0 %v295
    %562 = vmatpush.msra.mxu0 %v289
    %563 = vmatpush.msra.mxu0 %v283
    %564 = vmatpush.msra.mxu0 %v277
    %565 = vmatpush.msra.mxu0 %v271
    %566 = vmatpush.msra.mxu0 %v265
    %567 = vmatmul.f32.gmra.mxu0 %v164
    %v568 = vpop.f32.mrf.mxu0
    %v569 = vadd.f32 %v549, %v568
    %570 = vdwg.mxu0
    %571 = vmatpush.msra.mxu0 %v260
    %572 = vmatpush.msra.mxu0 %v254
    %573 = vmatpush.msra.mxu0 %v248
    %574 = vmatpush.msra.mxu0 %v242
    %575 = vmatpush.msra.mxu0 %v236
    %576 = vmatpush.msra.mxu0 %v230
    %577 = vmatpush.msra.mxu0 %v224
    %578 = vmatpush.msra.mxu0 %v218
    %579 = vmatpush.msra.mxu0 %v212
    %580 = vmatpush.msra.mxu0 %v206
    %581 = vmatpush.msra.mxu0 %v200
    %582 = vmatpush.msra.mxu0 %v194
    %583 = vmatpush.msra.mxu0 %v188
    %584 = vmatpush.msra.mxu0 %v182
    %585 = vmatpush.msra.mxu0 %v176
    %586 = vmatpush.msra.mxu0 %v170
    %587 = vmatmul.f32.gmra.mxu0 %v163
    %v588 = vpop.f32.mrf.mxu0
    %v589 = vadd.f32 %v364, %v588
    %590 = vdwg.mxu0
    %591 = vmatpush.msra.mxu0 %v356
    %592 = vmatpush.msra.mxu0 %v350
    %593 = vmatpush.msra.mxu0 %v344
    %594 = vmatpush.msra.mxu0 %v338
    %595 = vmatpush.msra.mxu0 %v332
    %596 = vmatpush.msra.mxu0 %v326
    %597 = vmatpush.msra.mxu0 %v320
    %598 = vmatpush.msra.mxu0 %v314
    %599 = vmatpush.msra.mxu0 %v308
    %600 = vmatpush.msra.mxu0 %v302
    %601 = vmatpush.msra.mxu0 %v296
    %602 = vmatpush.msra.mxu0 %v290
    %603 = vmatpush.msra.mxu0 %v284
    %604 = vmatpush.msra.mxu0 %v278
    %605 = vmatpush.msra.mxu0 %v272
    %606 = vmatpush.msra.mxu0 %v266
    %607 = vmatmul.f32.gmra.mxu0 %v164
    %v608 = vpop.f32.mrf.mxu0
    %v609 = vadd.f32 %v589, %v608
    %610 = vdwg.mxu0
    %v611 = vld [vmem:[%s1] sm:$0xff]
    %v612 = vld [vmem:[%s2] sm:$0xff]
    %v613 = vmul.f32 %v409, %v611
    %614 = vrot.lane.b32.xlu0 %v409, 64
    %v615 = vpop.permute.xlu0 %614
    %v616 = vmul.f32 %v615, %v612
    %v617 = vadd.f32 %v613, %v616
    %v618 = vmul.f32 %v617, 0.088388346
    %v619 = vmul.f32 %v489, %v611
    %620 = vrot.lane.b32.xlu0 %v489, 64
    %v621 = vpop.permute.xlu0 %620
    %v622 = vmul.f32 %v621, %v612
    %v623 = vadd.f32 %v619, %v622
    %v624 = vmul.f32 %v449, %v611
    %625 = vrot.lane.b32.xlu0 %v449, 64
    %v626 = vpop.permute.xlu0 %625
    %v627 = vmul.f32 %v626, %v612
    %v628 = vadd.f32 %v624, %v627
    %v629 = vmul.f32 %v628, 0.088388346
    %v630 = vmul.f32 %v529, %v611
    %631 = vrot.lane.b32.xlu0 %v529, 64
    %v632 = vpop.permute.xlu0 %631
    %v633 = vmul.f32 %v632, %v612
    %v634 = vadd.f32 %v630, %v633
    %v635 = vld [vmem:[%s6] sm:$0xff]
    %v636 = vld [vmem:[%s6 + $0x8] sm:$0xff]
    %v637 = vld [vmem:[%s6 + $0x10] sm:$0xff]
    %v638 = vld [vmem:[%s6 + $0x18] sm:$0xff]
    %v639 = vld [vmem:[%s6 + $0x20] sm:$0xff]
    %v640 = vld [vmem:[%s6 + $0x28] sm:$0xff]
    %v641 = vld [vmem:[%s7] sm:$0xff]
    %v642 = vld [vmem:[%s7 + $0x8] sm:$0xff]
    %v643 = vld [vmem:[%s7 + $0x10] sm:$0xff]
    %v644 = vld [vmem:[%s7 + $0x18] sm:$0xff]
    %v645 = vld [vmem:[%s7 + $0x20] sm:$0xff]
    %v646 = vld [vmem:[%s7 + $0x28] sm:$0xff]
    %647 = vst [vmem:[%s15] sm:$0xff] %v635
    %648 = vst [vmem:[%s15 + $0x8] sm:$0xff] %v636
    %649 = vst [vmem:[%s15 + $0x10] sm:$0xff] %v637
    %650 = vst [vmem:[%s15 + $0x18] sm:$0xff] %v638
    %651 = vst [vmem:[%s15 + $0x20] sm:$0xff] %v639
    %652 = vst [vmem:[%s15 + $0x28] sm:$0xff] %v640
    %653 = vst [vmem:[%s15 + $0x30] sm:$0xff] %v623
    %654 = vst [vmem:[%s15 + $0x38] sm:$0xff] %v634
    %655 = vst [vmem:[%s16] sm:$0xff] %v641
    %656 = vst [vmem:[%s16 + $0x8] sm:$0xff] %v642
    %657 = vst [vmem:[%s16 + $0x10] sm:$0xff] %v643
    %658 = vst [vmem:[%s16 + $0x18] sm:$0xff] %v644
    %659 = vst [vmem:[%s16 + $0x20] sm:$0xff] %v645
    %660 = vst [vmem:[%s16 + $0x28] sm:$0xff] %v646
    %661 = vst [vmem:[%s16 + $0x30] sm:$0xff] %v569
    %662 = vst [vmem:[%s16 + $0x38] sm:$0xff] %v609
    %v663 = vld [vmem:[%s8] sm:$0xff]
    %664 = vmatpush.xpose.msra.mxu0 0.0
    %665 = vmatpush.xpose.msra.mxu0 0.0
    %666 = vmatpush.xpose.msra.mxu0 0.0
    %667 = vmatpush.xpose.msra.mxu0 0.0
    %668 = vmatpush.xpose.msra.mxu0 0.0
    %669 = vmatpush.xpose.msra.mxu0 0.0
    %670 = vmatpush.xpose.msra.mxu0 0.0
    %671 = vmatpush.xpose.msra.mxu0 0.0
    %672 = vmatpush.xpose.msra.mxu0 0.0
    %673 = vmatpush.xpose.msra.mxu0 0.0
    %674 = vmatpush.xpose.msra.mxu0 0.0
    %675 = vmatpush.xpose.msra.mxu0 0.0
    %676 = vmatpush.xpose.msra.mxu0 %v623
    %677 = vmatpush.xpose.msra.mxu0 %v639
    %678 = vmatpush.xpose.msra.mxu0 %v637
    %679 = vmatpush.xpose.msra.mxu0 %v635
    %680 = vmatmul.f32.gmra.mxu0 %v618
    %v681 = vpop.f32.mrf.mxu0
    %v682 = vadd.f32 %v663, %v681
    %683 = vdwg.mxu0
    %vm684 = vcmask 261120
    %v685 = vsel %vm684, %v682, -inf
    %686 = vmax.xlane.f32.xlu0 %v685
    %v687 = vpop.xlane.xlu0 %686
    %v688 = vsub.f32 %v682, %v687
    %v689 = vmul.f32 %v688, 1.442695
    %v690 = vpow.pop %v689
    %v691 = vsel %vm684, %v690, 0.0
    %692 = vadd.xlane.f32.xlu0 %v691
    %v693 = vpop.xlane.xlu0 %692
    %v694 = vrcp.pop %v693
    %v695 = vmul.f32 %v690, %v694
    %v697 = vsel %vm684, %v695, 0
    %699 = vmatpush.msra.mxu0 0.0
    %700 = vmatpush.msra.mxu0 0.0
    %701 = vmatpush.msra.mxu0 0.0
    %702 = vmatpush.msra.mxu0 0.0
    %703 = vmatpush.msra.mxu0 0.0
    %704 = vmatpush.msra.mxu0 0.0
    %705 = vmatpush.msra.mxu0 0.0
    %706 = vmatpush.msra.mxu0 0.0
    %707 = vmatpush.msra.mxu0 0.0
    %708 = vmatpush.msra.mxu0 0.0
    %709 = vmatpush.msra.mxu0 0.0
    %710 = vmatpush.msra.mxu0 0.0
    %711 = vmatpush.msra.mxu0 %v569
    %712 = vmatpush.msra.mxu0 %v645
    %713 = vmatpush.msra.mxu0 %v643
    %714 = vmatpush.msra.mxu0 %v641
    %715 = vmatmul.f32.gmra.mxu0 %v697
    %v716 = vpop.f32.mrf.mxu0
    %v717 = vadd.f32 0.0, %v716
    %718 = vdwg.mxu0
    %719 = vmatpush.xpose.msra.mxu0 0.0
    %720 = vmatpush.xpose.msra.mxu0 0.0
    %721 = vmatpush.xpose.msra.mxu0 0.0
    %722 = vmatpush.xpose.msra.mxu0 0.0
    %723 = vmatpush.xpose.msra.mxu0 0.0
    %724 = vmatpush.xpose.msra.mxu0 0.0
    %725 = vmatpush.xpose.msra.mxu0 0.0
    %726 = vmatpush.xpose.msra.mxu0 0.0
    %727 = vmatpush.xpose.msra.mxu0 0.0
    %728 = vmatpush.xpose.msra.mxu0 0.0
    %729 = vmatpush.xpose.msra.mxu0 0.0
    %730 = vmatpush.xpose.msra.mxu0 0.0
    %731 = vmatpush.xpose.msra.mxu0 %v634
    %732 = vmatpush.xpose.msra.mxu0 %v640
    %733 = vmatpush.xpose.msra.mxu0 %v638
    %734 = vmatpush.xpose.msra.mxu0 %v636
    %735 = vmatmul.f32.gmra.mxu0 %v629
    %v736 = vpop.f32.mrf.mxu0
    %v737 = vadd.f32 %v663, %v736
    %738 = vdwg.mxu0
    %v739 = vsel %vm684, %v737, -inf
    %740 = vmax.xlane.f32.xlu0 %v739
    %v741 = vpop.xlane.xlu0 %740
    %v742 = vsub.f32 %v737, %v741
    %v743 = vmul.f32 %v742, 1.442695
    %v744 = vpow.pop %v743
    %v745 = vsel %vm684, %v744, 0.0
    %746 = vadd.xlane.f32.xlu0 %v745
    %v747 = vpop.xlane.xlu0 %746
    %v748 = vrcp.pop %v747
    %v749 = vmul.f32 %v744, %v748
    %v751 = vsel %vm684, %v749, 0
    %753 = vmatpush.msra.mxu0 0.0
    %754 = vmatpush.msra.mxu0 0.0
    %755 = vmatpush.msra.mxu0 0.0
    %756 = vmatpush.msra.mxu0 0.0
    %757 = vmatpush.msra.mxu0 0.0
    %758 = vmatpush.msra.mxu0 0.0
    %759 = vmatpush.msra.mxu0 0.0
    %760 = vmatpush.msra.mxu0 0.0
    %761 = vmatpush.msra.mxu0 0.0
    %762 = vmatpush.msra.mxu0 0.0
    %763 = vmatpush.msra.mxu0 0.0
    %764 = vmatpush.msra.mxu0 0.0
    %765 = vmatpush.msra.mxu0 %v609
    %766 = vmatpush.msra.mxu0 %v646
    %767 = vmatpush.msra.mxu0 %v644
    %768 = vmatpush.msra.mxu0 %v642
    %769 = vmatmul.f32.gmra.mxu0 %v751
    %v770 = vpop.f32.mrf.mxu0
    %v771 = vadd.f32 0.0, %v770
    %772 = vdwg.mxu0
    %v773 = vld [vmem:[#allocation5] sm:$0xff]
    %v774 = vld [vmem:[#allocation5 + $0x8] sm:$0xff]
    %v775 = vld [vmem:[#allocation5 + $0x10] sm:$0xff]
    %v776 = vld [vmem:[#allocation5 + $0x18] sm:$0xff]
    %v777 = vld [vmem:[#allocation5 + $0x20] sm:$0xff]
    %v778 = vld [vmem:[#allocation5 + $0x28] sm:$0xff]
    %v779 = vld [vmem:[#allocation5 + $0x30] sm:$0xff]
    %v780 = vld [vmem:[#allocation5 + $0x38] sm:$0xff]
    %v781 = vld [vmem:[#allocation5 + $0x40] sm:$0xff]
    %v782 = vld [vmem:[#allocation5 + $0x48] sm:$0xff]
    %v783 = vld [vmem:[#allocation5 + $0x50] sm:$0xff]
    %v784 = vld [vmem:[#allocation5 + $0x58] sm:$0xff]
    %v785 = vld [vmem:[#allocation5 + $0x60] sm:$0xff]
    %v786 = vld [vmem:[#allocation5 + $0x68] sm:$0xff]
    %v787 = vld [vmem:[#allocation5 + $0x70] sm:$0xff]
    %v788 = vld [vmem:[#allocation5 + $0x78] sm:$0xff]
    %v789 = vld [vmem:[#allocation5 + $0x80] sm:$0xff]
    %v790 = vld [vmem:[#allocation5 + $0x88] sm:$0xff]
    %v791 = vld [vmem:[#allocation5 + $0x90] sm:$0xff]
    %v792 = vld [vmem:[#allocation5 + $0x98] sm:$0xff]
    %v793 = vld [vmem:[#allocation5 + $0xa0] sm:$0xff]
    %v794 = vld [vmem:[#allocation5 + $0xa8] sm:$0xff]
    %v795 = vld [vmem:[#allocation5 + $0xb0] sm:$0xff]
    %v796 = vld [vmem:[#allocation5 + $0xb8] sm:$0xff]
    %v797 = vld [vmem:[#allocation5 + $0xc0] sm:$0xff]
    %v798 = vld [vmem:[#allocation5 + $0xc8] sm:$0xff]
    %v799 = vld [vmem:[#allocation5 + $0xd0] sm:$0xff]
    %v800 = vld [vmem:[#allocation5 + $0xd8] sm:$0xff]
    %v801 = vld [vmem:[#allocation5 + $0xe0] sm:$0xff]
    %v802 = vld [vmem:[#allocation5 + $0xe8] sm:$0xff]
    %v803 = vld [vmem:[#allocation5 + $0xf0] sm:$0xff]
    %v804 = vld [vmem:[#allocation5 + $0xf8] sm:$0xff]
    %v805 = vld [vmem:[#allocation5 + $0x100] sm:$0xff]
    %v806 = vld [vmem:[#allocation5 + $0x108] sm:$0xff]
    %v807 = vld [vmem:[#allocation5 + $0x110] sm:$0xff]
    %v808 = vld [vmem:[#allocation5 + $0x118] sm:$0xff]
    %v809 = vld [vmem:[#allocation5 + $0x120] sm:$0xff]
    %v810 = vld [vmem:[#allocation5 + $0x128] sm:$0xff]
    %v811 = vld [vmem:[#allocation5 + $0x130] sm:$0xff]
    %v812 = vld [vmem:[#allocation5 + $0x138] sm:$0xff]
    %v813 = vld [vmem:[#allocation5 + $0x140] sm:$0xff]
    %v814 = vld [vmem:[#allocation5 + $0x148] sm:$0xff]
    %v815 = vld [vmem:[#allocation5 + $0x150] sm:$0xff]
    %v816 = vld [vmem:[#allocation5 + $0x158] sm:$0xff]
    %v817 = vld [vmem:[#allocation5 + $0x160] sm:$0xff]
    %v818 = vld [vmem:[#allocation5 + $0x168] sm:$0xff]
    %v819 = vld [vmem:[#allocation5 + $0x170] sm:$0xff]
    %v820 = vld [vmem:[#allocation5 + $0x178] sm:$0xff]
    %v821 = vld [vmem:[#allocation5 + $0x180] sm:$0xff]
    %v822 = vld [vmem:[#allocation5 + $0x188] sm:$0xff]
    %v823 = vld [vmem:[#allocation5 + $0x190] sm:$0xff]
    %v824 = vld [vmem:[#allocation5 + $0x198] sm:$0xff]
    %v825 = vld [vmem:[#allocation5 + $0x1a0] sm:$0xff]
    %v826 = vld [vmem:[#allocation5 + $0x1a8] sm:$0xff]
    %v827 = vld [vmem:[#allocation5 + $0x1b0] sm:$0xff]
    %v828 = vld [vmem:[#allocation5 + $0x1b8] sm:$0xff]
    %v829 = vld [vmem:[#allocation5 + $0x1c0] sm:$0xff]
    %v830 = vld [vmem:[#allocation5 + $0x1c8] sm:$0xff]
    %v831 = vld [vmem:[#allocation5 + $0x1d0] sm:$0xff]
    %v832 = vld [vmem:[#allocation5 + $0x1d8] sm:$0xff]
    %v833 = vld [vmem:[#allocation5 + $0x1e0] sm:$0xff]
    %v834 = vld [vmem:[#allocation5 + $0x1e8] sm:$0xff]
    %v835 = vld [vmem:[#allocation5 + $0x1f0] sm:$0xff]
    %v836 = vld [vmem:[#allocation5 + $0x1f8] sm:$0xff]
    %837 = vmatpush.msra.mxu0 %v803
    %838 = vmatpush.msra.mxu0 %v801
    %839 = vmatpush.msra.mxu0 %v799
    %840 = vmatpush.msra.mxu0 %v797
    %841 = vmatpush.msra.mxu0 %v795
    %842 = vmatpush.msra.mxu0 %v793
    %843 = vmatpush.msra.mxu0 %v791
    %844 = vmatpush.msra.mxu0 %v789
    %845 = vmatpush.msra.mxu0 %v787
    %846 = vmatpush.msra.mxu0 %v785
    %847 = vmatpush.msra.mxu0 %v783
    %848 = vmatpush.msra.mxu0 %v781
    %849 = vmatpush.msra.mxu0 %v779
    %850 = vmatpush.msra.mxu0 %v777
    %851 = vmatpush.msra.mxu0 %v775
    %852 = vmatpush.msra.mxu0 %v773
    %853 = vmatmul.f32.gmra.mxu0 %v717
    %v854 = vpop.f32.mrf.mxu0
    %v855 = vadd.f32 %v129, %v854
    %856 = vdwg.mxu0
    %857 = vmatpush.msra.mxu0 %v835
    %858 = vmatpush.msra.mxu0 %v833
    %859 = vmatpush.msra.mxu0 %v831
    %860 = vmatpush.msra.mxu0 %v829
    %861 = vmatpush.msra.mxu0 %v827
    %862 = vmatpush.msra.mxu0 %v825
    %863 = vmatpush.msra.mxu0 %v823
    %864 = vmatpush.msra.mxu0 %v821
    %865 = vmatpush.msra.mxu0 %v819
    %866 = vmatpush.msra.mxu0 %v817
    %867 = vmatpush.msra.mxu0 %v815
    %868 = vmatpush.msra.mxu0 %v813
    %869 = vmatpush.msra.mxu0 %v811
    %870 = vmatpush.msra.mxu0 %v809
    %871 = vmatpush.msra.mxu0 %v807
    %872 = vmatpush.msra.mxu0 %v805
    %873 = vmatmul.f32.gmra.mxu0 %v771
    %v874 = vpop.f32.mrf.mxu0
    %v875 = vadd.f32 %v855, %v874
    %876 = vdwg.mxu0
    %877 = vmatpush.msra.mxu0 %v804
    %878 = vmatpush.msra.mxu0 %v802
    %879 = vmatpush.msra.mxu0 %v800
    %880 = vmatpush.msra.mxu0 %v798
    %881 = vmatpush.msra.mxu0 %v796
    %882 = vmatpush.msra.mxu0 %v794
    %883 = vmatpush.msra.mxu0 %v792
    %884 = vmatpush.msra.mxu0 %v790
    %885 = vmatpush.msra.mxu0 %v788
    %886 = vmatpush.msra.mxu0 %v786
    %887 = vmatpush.msra.mxu0 %v784
    %888 = vmatpush.msra.mxu0 %v782
    %889 = vmatpush.msra.mxu0 %v780
    %890 = vmatpush.msra.mxu0 %v778
    %891 = vmatpush.msra.mxu0 %v776
    %892 = vmatpush.msra.mxu0 %v774
    %893 = vmatmul.f32.gmra.mxu0 %v717
    %v894 = vpop.f32.mrf.mxu0
    %v895 = vadd.f32 %v130, %v894
    %896 = vdwg.mxu0
    %897 = vmatpush.msra.mxu0 %v836
    %898 = vmatpush.msra.mxu0 %v834
    %899 = vmatpush.msra.mxu0 %v832
    %900 = vmatpush.msra.mxu0 %v830
    %901 = vmatpush.msra.mxu0 %v828
    %902 = vmatpush.msra.mxu0 %v826
    %903 = vmatpush.msra.mxu0 %v824
    %904 = vmatpush.msra.mxu0 %v822
    %905 = vmatpush.msra.mxu0 %v820
    %906 = vmatpush.msra.mxu0 %v818
    %907 = vmatpush.msra.mxu0 %v816
    %908 = vmatpush.msra.mxu0 %v814
    %909 = vmatpush.msra.mxu0 %v812
    %910 = vmatpush.msra.mxu0 %v810
    %911 = vmatpush.msra.mxu0 %v808
    %912 = vmatpush.msra.mxu0 %v806
    %913 = vmatmul.f32.gmra.mxu0 %v771
    %v914 = vpop.f32.mrf.mxu0
    %v915 = vadd.f32 %v895, %v914
    %916 = vdwg.mxu0
    %v917 = vld [vmem:[%s10] sm:$0x3]
    %v918 = vmul.f32 %v875, %v875
    %v919 = vmul.f32 %v915, %v915
    %v920 = vadd.f32 %v918, %v919
    %921 = vadd.xlane.f32.xlu0 %v920
    %v922 = vpop.xlane.xlu0 %921
    %v923 = vmul.f32 %v922, %v143
    %v924 = vadd.f32 %v923, 1e-06
    %v925 = vrsqrt.pop %v924
    %v926 = vmul.f32 %v925, %v924
    %v927 = vmul.f32 %v926, %v925
    %v928 = vmul.f32 0.5, %v927
    %v929 = vsub.f32 1.5, %v928
    %v930 = vmul.f32 %v925, %v929
    %vm931 = vweird.f32 %v924
    %vm932 = vweird.f32 %v925
    %vm933 = vmor %vm931, %vm932
    %v934 = vsel %vm933, %v925, %v930
    %v935 = vmul.f32 %v875, %v934
    %v936 = vmul.f32 %v915, %v934
    %v938 = vperm.slane %v917, 0
    %v939 = vperm.slane %v917, 1
    %v942 = vmul.f32 %v935, %v938
    %v943 = vmul.f32 %v936, %v939
    %v944 = vld [vmem:[#allocation7] sm:$0xff]
    %v945 = vld [vmem:[#allocation7 + $0x8] sm:$0xff]
    %v946 = vld [vmem:[#allocation7 + $0x10] sm:$0xff]
    %v947 = vld [vmem:[#allocation7 + $0x18] sm:$0xff]
    %v948 = vld [vmem:[#allocation7 + $0x20] sm:$0xff]
    %v949 = vld [vmem:[#allocation7 + $0x28] sm:$0xff]
    %v950 = vld [vmem:[#allocation7 + $0x30] sm:$0xff]
    %v951 = vld [vmem:[#allocation7 + $0x38] sm:$0xff]
    %v952 = vld [vmem:[#allocation7 + $0x40] sm:$0xff]
    %v953 = vld [vmem:[#allocation7 + $0x48] sm:$0xff]
    %v954 = vld [vmem:[#allocation7 + $0x50] sm:$0xff]
    %v955 = vld [vmem:[#allocation7 + $0x58] sm:$0xff]
    %v956 = vld [vmem:[#allocation7 + $0x60] sm:$0xff]
    %v957 = vld [vmem:[#allocation7 + $0x68] sm:$0xff]
    %v958 = vld [vmem:[#allocation7 + $0x70] sm:$0xff]
    %v959 = vld [vmem:[#allocation7 + $0x78] sm:$0xff]
    %v960 = vld [vmem:[#allocation7 + $0x80] sm:$0xff]
    %v961 = vld [vmem:[#allocation7 + $0x88] sm:$0xff]
    %v962 = vld [vmem:[#allocation7 + $0x90] sm:$0xff]
    %v963 = vld [vmem:[#allocation7 + $0x98] sm:$0xff]
    %v964 = vld [vmem:[#allocation7 + $0xa0] sm:$0xff]
    %v965 = vld [vmem:[#allocation7 + $0xa8] sm:$0xff]
    %v966 = vld [vmem:[#allocation7 + $0xb0] sm:$0xff]
    %v967 = vld [vmem:[#allocation7 + $0xb8] sm:$0xff]
    %v968 = vld [vmem:[#allocation7 + $0xc0] sm:$0xff]
    %v969 = vld [vmem:[#allocation7 + $0xc8] sm:$0xff]
    %v970 = vld [vmem:[#allocation7 + $0xd0] sm:$0xff]
    %v971 = vld [vmem:[#allocation7 + $0xd8] sm:$0xff]
    %v972 = vld [vmem:[#allocation7 + $0xe0] sm:$0xff]
    %v973 = vld [vmem:[#allocation7 + $0xe8] sm:$0xff]
    %v974 = vld [vmem:[#allocation7 + $0xf0] sm:$0xff]
    %v975 = vld [vmem:[#allocation7 + $0xf8] sm:$0xff]
    %v976 = vld [vmem:[#allocation7 + $0x100] sm:$0xff]
    %v977 = vld [vmem:[#allocation7 + $0x108] sm:$0xff]
    %v978 = vld [vmem:[#allocation7 + $0x110] sm:$0xff]
    %v979 = vld [vmem:[#allocation7 + $0x118] sm:$0xff]
    %v980 = vld [vmem:[#allocation7 + $0x120] sm:$0xff]
    %v981 = vld [vmem:[#allocation7 + $0x128] sm:$0xff]
    %v982 = vld [vmem:[#allocation7 + $0x130] sm:$0xff]
    %v983 = vld [vmem:[#allocation7 + $0x138] sm:$0xff]
    %v984 = vld [vmem:[#allocation7 + $0x140] sm:$0xff]
    %v985 = vld [vmem:[#allocation7 + $0x148] sm:$0xff]
    %v986 = vld [vmem:[#allocation7 + $0x150] sm:$0xff]
    %v987 = vld [vmem:[#allocation7 + $0x158] sm:$0xff]
    %v988 = vld [vmem:[#allocation7 + $0x160] sm:$0xff]
    %v989 = vld [vmem:[#allocation7 + $0x168] sm:$0xff]
    %v990 = vld [vmem:[#allocation7 + $0x170] sm:$0xff]
    %v991 = vld [vmem:[#allocation7 + $0x178] sm:$0xff]
    %v992 = vld [vmem:[#allocation7 + $0x180] sm:$0xff]
    %v993 = vld [vmem:[#allocation7 + $0x188] sm:$0xff]
    %v994 = vld [vmem:[#allocation7 + $0x190] sm:$0xff]
    %v995 = vld [vmem:[#allocation7 + $0x198] sm:$0xff]
    %v996 = vld [vmem:[#allocation7 + $0x1a0] sm:$0xff]
    %v997 = vld [vmem:[#allocation7 + $0x1a8] sm:$0xff]
    %v998 = vld [vmem:[#allocation7 + $0x1b0] sm:$0xff]
    %v999 = vld [vmem:[#allocation7 + $0x1b8] sm:$0xff]
    %v1000 = vld [vmem:[#allocation7 + $0x1c0] sm:$0xff]
    %v1001 = vld [vmem:[#allocation7 + $0x1c8] sm:$0xff]
    %v1002 = vld [vmem:[#allocation7 + $0x1d0] sm:$0xff]
    %v1003 = vld [vmem:[#allocation7 + $0x1d8] sm:$0xff]
    %v1004 = vld [vmem:[#allocation7 + $0x1e0] sm:$0xff]
    %v1005 = vld [vmem:[#allocation7 + $0x1e8] sm:$0xff]
    %v1006 = vld [vmem:[#allocation7 + $0x1f0] sm:$0xff]
    %v1007 = vld [vmem:[#allocation7 + $0x1f8] sm:$0xff]
    %1008 = vmatpush.msra.mxu0 %v974
    %1009 = vmatpush.msra.mxu0 %v972
    %1010 = vmatpush.msra.mxu0 %v970
    %1011 = vmatpush.msra.mxu0 %v968
    %1012 = vmatpush.msra.mxu0 %v966
    %1013 = vmatpush.msra.mxu0 %v964
    %1014 = vmatpush.msra.mxu0 %v962
    %1015 = vmatpush.msra.mxu0 %v960
    %1016 = vmatpush.msra.mxu0 %v958
    %1017 = vmatpush.msra.mxu0 %v956
    %1018 = vmatpush.msra.mxu0 %v954
    %1019 = vmatpush.msra.mxu0 %v952
    %1020 = vmatpush.msra.mxu0 %v950
    %1021 = vmatpush.msra.mxu0 %v948
    %1022 = vmatpush.msra.mxu0 %v946
    %1023 = vmatpush.msra.mxu0 %v944
    %1024 = vmatmul.f32.gmra.mxu0 %v942
    %v1025 = vpop.f32.mrf.mxu0
    %v1026 = vadd.f32 0.0, %v1025
    %1027 = vdwg.mxu0
    %1028 = vmatpush.msra.mxu0 %v1006
    %1029 = vmatpush.msra.mxu0 %v1004
    %1030 = vmatpush.msra.mxu0 %v1002
    %1031 = vmatpush.msra.mxu0 %v1000
    %1032 = vmatpush.msra.mxu0 %v998
    %1033 = vmatpush.msra.mxu0 %v996
    %1034 = vmatpush.msra.mxu0 %v994
    %1035 = vmatpush.msra.mxu0 %v992
    %1036 = vmatpush.msra.mxu0 %v990
    %1037 = vmatpush.msra.mxu0 %v988
    %1038 = vmatpush.msra.mxu0 %v986
    %1039 = vmatpush.msra.mxu0 %v984
    %1040 = vmatpush.msra.mxu0 %v982
    %1041 = vmatpush.msra.mxu0 %v980
    %1042 = vmatpush.msra.mxu0 %v978
    %1043 = vmatpush.msra.mxu0 %v976
    %1044 = vmatmul.f32.gmra.mxu0 %v943
    %v1045 = vpop.f32.mrf.mxu0
    %v1046 = vadd.f32 %v1026, %v1045
    %1047 = vdwg.mxu0
    %1048 = vmatpush.msra.mxu0 %v975
    %1049 = vmatpush.msra.mxu0 %v973
    %1050 = vmatpush.msra.mxu0 %v971
    %1051 = vmatpush.msra.mxu0 %v969
    %1052 = vmatpush.msra.mxu0 %v967
    %1053 = vmatpush.msra.mxu0 %v965
    %1054 = vmatpush.msra.mxu0 %v963
    %1055 = vmatpush.msra.mxu0 %v961
    %1056 = vmatpush.msra.mxu0 %v959
    %1057 = vmatpush.msra.mxu0 %v957
    %1058 = vmatpush.msra.mxu0 %v955
    %1059 = vmatpush.msra.mxu0 %v953
    %1060 = vmatpush.msra.mxu0 %v951
    %1061 = vmatpush.msra.mxu0 %v949
    %1062 = vmatpush.msra.mxu0 %v947
    %1063 = vmatpush.msra.mxu0 %v945
    %1064 = vmatmul.f32.gmra.mxu0 %v942
    %v1065 = vpop.f32.mrf.mxu0
    %v1066 = vadd.f32 0.0, %v1065
    %1067 = vdwg.mxu0
    %1068 = vmatpush.msra.mxu0 %v1007
    %1069 = vmatpush.msra.mxu0 %v1005
    %1070 = vmatpush.msra.mxu0 %v1003
    %1071 = vmatpush.msra.mxu0 %v1001
    %1072 = vmatpush.msra.mxu0 %v999
    %1073 = vmatpush.msra.mxu0 %v997
    %1074 = vmatpush.msra.mxu0 %v995
    %1075 = vmatpush.msra.mxu0 %v993
    %1076 = vmatpush.msra.mxu0 %v991
    %1077 = vmatpush.msra.mxu0 %v989
    %1078 = vmatpush.msra.mxu0 %v987
    %1079 = vmatpush.msra.mxu0 %v985
    %1080 = vmatpush.msra.mxu0 %v983
    %1081 = vmatpush.msra.mxu0 %v981
    %1082 = vmatpush.msra.mxu0 %v979
    %1083 = vmatpush.msra.mxu0 %v977
    %1084 = vmatmul.f32.gmra.mxu0 %v943
    %v1085 = vpop.f32.mrf.mxu0
    %v1086 = vadd.f32 %v1066, %v1085
    %1087 = vdwg.mxu0
    %v1088 = vld [vmem:[#allocation8] sm:$0xff]
    %v1089 = vld [vmem:[#allocation8 + $0x8] sm:$0xff]
    %v1090 = vld [vmem:[#allocation8 + $0x10] sm:$0xff]
    %v1091 = vld [vmem:[#allocation8 + $0x18] sm:$0xff]
    %v1092 = vld [vmem:[#allocation8 + $0x20] sm:$0xff]
    %v1093 = vld [vmem:[#allocation8 + $0x28] sm:$0xff]
    %v1094 = vld [vmem:[#allocation8 + $0x30] sm:$0xff]
    %v1095 = vld [vmem:[#allocation8 + $0x38] sm:$0xff]
    %v1096 = vld [vmem:[#allocation8 + $0x40] sm:$0xff]
    %v1097 = vld [vmem:[#allocation8 + $0x48] sm:$0xff]
    %v1098 = vld [vmem:[#allocation8 + $0x50] sm:$0xff]
    %v1099 = vld [vmem:[#allocation8 + $0x58] sm:$0xff]
    %v1100 = vld [vmem:[#allocation8 + $0x60] sm:$0xff]
    %v1101 = vld [vmem:[#allocation8 + $0x68] sm:$0xff]
    %v1102 = vld [vmem:[#allocation8 + $0x70] sm:$0xff]
    %v1103 = vld [vmem:[#allocation8 + $0x78] sm:$0xff]
    %v1104 = vld [vmem:[#allocation8 + $0x80] sm:$0xff]
    %v1105 = vld [vmem:[#allocation8 + $0x88] sm:$0xff]
    %v1106 = vld [vmem:[#allocation8 + $0x90] sm:$0xff]
    %v1107 = vld [vmem:[#allocation8 + $0x98] sm:$0xff]
    %v1108 = vld [vmem:[#allocation8 + $0xa0] sm:$0xff]
    %v1109 = vld [vmem:[#allocation8 + $0xa8] sm:$0xff]
    %v1110 = vld [vmem:[#allocation8 + $0xb0] sm:$0xff]
    %v1111 = vld [vmem:[#allocation8 + $0xb8] sm:$0xff]
    %v1112 = vld [vmem:[#allocation8 + $0xc0] sm:$0xff]
    %v1113 = vld [vmem:[#allocation8 + $0xc8] sm:$0xff]
    %v1114 = vld [vmem:[#allocation8 + $0xd0] sm:$0xff]
    %v1115 = vld [vmem:[#allocation8 + $0xd8] sm:$0xff]
    %v1116 = vld [vmem:[#allocation8 + $0xe0] sm:$0xff]
    %v1117 = vld [vmem:[#allocation8 + $0xe8] sm:$0xff]
    %v1118 = vld [vmem:[#allocation8 + $0xf0] sm:$0xff]
    %v1119 = vld [vmem:[#allocation8 + $0xf8] sm:$0xff]
    %v1120 = vld [vmem:[#allocation8 + $0x100] sm:$0xff]
    %v1121 = vld [vmem:[#allocation8 + $0x108] sm:$0xff]
    %v1122 = vld [vmem:[#allocation8 + $0x110] sm:$0xff]
    %v1123 = vld [vmem:[#allocation8 + $0x118] sm:$0xff]
    %v1124 = vld [vmem:[#allocation8 + $0x120] sm:$0xff]
    %v1125 = vld [vmem:[#allocation8 + $0x128] sm:$0xff]
    %v1126 = vld [vmem:[#allocation8 + $0x130] sm:$0xff]
    %v1127 = vld [vmem:[#allocation8 + $0x138] sm:$0xff]
    %v1128 = vld [vmem:[#allocation8 + $0x140] sm:$0xff]
    %v1129 = vld [vmem:[#allocation8 + $0x148] sm:$0xff]
    %v1130 = vld [vmem:[#allocation8 + $0x150] sm:$0xff]
    %v1131 = vld [vmem:[#allocation8 + $0x158] sm:$0xff]
    %v1132 = vld [vmem:[#allocation8 + $0x160] sm:$0xff]
    %v1133 = vld [vmem:[#allocation8 + $0x168] sm:$0xff]
    %v1134 = vld [vmem:[#allocation8 + $0x170] sm:$0xff]
    %v1135 = vld [vmem:[#allocation8 + $0x178] sm:$0xff]
    %v1136 = vld [vmem:[#allocation8 + $0x180] sm:$0xff]
    %v1137 = vld [vmem:[#allocation8 + $0x188] sm:$0xff]
    %v1138 = vld [vmem:[#allocation8 + $0x190] sm:$0xff]
    %v1139 = vld [vmem:[#allocation8 + $0x198] sm:$0xff]
    %v1140 = vld [vmem:[#allocation8 + $0x1a0] sm:$0xff]
    %v1141 = vld [vmem:[#allocation8 + $0x1a8] sm:$0xff]
    %v1142 = vld [vmem:[#allocation8 + $0x1b0] sm:$0xff]
    %v1143 = vld [vmem:[#allocation8 + $0x1b8] sm:$0xff]
    %v1144 = vld [vmem:[#allocation8 + $0x1c0] sm:$0xff]
    %v1145 = vld [vmem:[#allocation8 + $0x1c8] sm:$0xff]
    %v1146 = vld [vmem:[#allocation8 + $0x1d0] sm:$0xff]
    %v1147 = vld [vmem:[#allocation8 + $0x1d8] sm:$0xff]
    %v1148 = vld [vmem:[#allocation8 + $0x1e0] sm:$0xff]
    %v1149 = vld [vmem:[#allocation8 + $0x1e8] sm:$0xff]
    %v1150 = vld [vmem:[#allocation8 + $0x1f0] sm:$0xff]
    %v1151 = vld [vmem:[#allocation8 + $0x1f8] sm:$0xff]
    %1152 = vmatpush.msra.mxu0 %v1118
    %1153 = vmatpush.msra.mxu0 %v1116
    %1154 = vmatpush.msra.mxu0 %v1114
    %1155 = vmatpush.msra.mxu0 %v1112
    %1156 = vmatpush.msra.mxu0 %v1110
    %1157 = vmatpush.msra.mxu0 %v1108
    %1158 = vmatpush.msra.mxu0 %v1106
    %1159 = vmatpush.msra.mxu0 %v1104
    %1160 = vmatpush.msra.mxu0 %v1102
    %1161 = vmatpush.msra.mxu0 %v1100
    %1162 = vmatpush.msra.mxu0 %v1098
    %1163 = vmatpush.msra.mxu0 %v1096
    %1164 = vmatpush.msra.mxu0 %v1094
    %1165 = vmatpush.msra.mxu0 %v1092
    %1166 = vmatpush.msra.mxu0 %v1090
    %1167 = vmatpush.msra.mxu0 %v1088
    %1168 = vmatmul.f32.gmra.mxu0 %v942
    %v1169 = vpop.f32.mrf.mxu0
    %v1170 = vadd.f32 0.0, %v1169
    %1171 = vdwg.mxu0
    %1172 = vmatpush.msra.mxu0 %v1150
    %1173 = vmatpush.msra.mxu0 %v1148
    %1174 = vmatpush.msra.mxu0 %v1146
    %1175 = vmatpush.msra.mxu0 %v1144
    %1176 = vmatpush.msra.mxu0 %v1142
    %1177 = vmatpush.msra.mxu0 %v1140
    %1178 = vmatpush.msra.mxu0 %v1138
    %1179 = vmatpush.msra.mxu0 %v1136
    %1180 = vmatpush.msra.mxu0 %v1134
    %1181 = vmatpush.msra.mxu0 %v1132
    %1182 = vmatpush.msra.mxu0 %v1130
    %1183 = vmatpush.msra.mxu0 %v1128
    %1184 = vmatpush.msra.mxu0 %v1126
    %1185 = vmatpush.msra.mxu0 %v1124
    %1186 = vmatpush.msra.mxu0 %v1122
    %1187 = vmatpush.msra.mxu0 %v1120
    %1188 = vmatmul.f32.gmra.mxu0 %v943
    %v1189 = vpop.f32.mrf.mxu0
    %v1190 = vadd.f32 %v1170, %v1189
    %1191 = vdwg.mxu0
    %1192 = vmatpush.msra.mxu0 %v1119
    %1193 = vmatpush.msra.mxu0 %v1117
    %1194 = vmatpush.msra.mxu0 %v1115
    %1195 = vmatpush.msra.mxu0 %v1113
    %1196 = vmatpush.msra.mxu0 %v1111
    %1197 = vmatpush.msra.mxu0 %v1109
    %1198 = vmatpush.msra.mxu0 %v1107
    %1199 = vmatpush.msra.mxu0 %v1105
    %1200 = vmatpush.msra.mxu0 %v1103
    %1201 = vmatpush.msra.mxu0 %v1101
    %1202 = vmatpush.msra.mxu0 %v1099
    %1203 = vmatpush.msra.mxu0 %v1097
    %1204 = vmatpush.msra.mxu0 %v1095
    %1205 = vmatpush.msra.mxu0 %v1093
    %1206 = vmatpush.msra.mxu0 %v1091
    %1207 = vmatpush.msra.mxu0 %v1089
    %1208 = vmatmul.f32.gmra.mxu0 %v942
    %v1209 = vpop.f32.mrf.mxu0
    %v1210 = vadd.f32 0.0, %v1209
    %1211 = vdwg.mxu0
    %1212 = vmatpush.msra.mxu0 %v1151
    %1213 = vmatpush.msra.mxu0 %v1149
    %1214 = vmatpush.msra.mxu0 %v1147
    %1215 = vmatpush.msra.mxu0 %v1145
    %1216 = vmatpush.msra.mxu0 %v1143
    %1217 = vmatpush.msra.mxu0 %v1141
    %1218 = vmatpush.msra.mxu0 %v1139
    %1219 = vmatpush.msra.mxu0 %v1137
    %1220 = vmatpush.msra.mxu0 %v1135
    %1221 = vmatpush.msra.mxu0 %v1133
    %1222 = vmatpush.msra.mxu0 %v1131
    %1223 = vmatpush.msra.mxu0 %v1129
    %1224 = vmatpush.msra.mxu0 %v1127
    %1225 = vmatpush.msra.mxu0 %v1125
    %1226 = vmatpush.msra.mxu0 %v1123
    %1227 = vmatpush.msra.mxu0 %v1121
    %1228 = vmatmul.f32.gmra.mxu0 %v943
    %v1229 = vpop.f32.mrf.mxu0
    %v1230 = vadd.f32 %v1210, %v1229
    %1231 = vdwg.mxu0
    %v1232 = vsub.f32 0.0, %v1190
    %v1233 = vsub.f32 0.0, %v1230
    %v1234 = vmul.f32 %v1232, 1.442695
    %v1235 = vpow.pop %v1234
    %v1236 = vmul.f32 %v1233, 1.442695
    %v1237 = vpow.pop %v1236
    %v1238 = vadd.f32 %v1235, 1.0
    %v1239 = vadd.f32 %v1237, 1.0
    %v1240 = vrcp.pop %v1238
    %v1241 = vrcp.pop %v1239
    %v1242 = vmul.f32 %v1190, %v1240
    %v1243 = vmul.f32 %v1230, %v1241
    %v1244 = vmul.f32 %v1046, %v1242
    %v1245 = vmul.f32 %v1086, %v1243
    %v1246 = vld [vmem:[#allocation10] sm:$0xff]
    %v1247 = vld [vmem:[#allocation10 + $0x8] sm:$0xff]
    %v1248 = vld [vmem:[#allocation10 + $0x10] sm:$0xff]
    %v1249 = vld [vmem:[#allocation10 + $0x18] sm:$0xff]
    %v1250 = vld [vmem:[#allocation10 + $0x20] sm:$0xff]
    %v1251 = vld [vmem:[#allocation10 + $0x28] sm:$0xff]
    %v1252 = vld [vmem:[#allocation10 + $0x30] sm:$0xff]
    %v1253 = vld [vmem:[#allocation10 + $0x38] sm:$0xff]
    %v1254 = vld [vmem:[#allocation10 + $0x40] sm:$0xff]
    %v1255 = vld [vmem:[#allocation10 + $0x48] sm:$0xff]
    %v1256 = vld [vmem:[#allocation10 + $0x50] sm:$0xff]
    %v1257 = vld [vmem:[#allocation10 + $0x58] sm:$0xff]
    %v1258 = vld [vmem:[#allocation10 + $0x60] sm:$0xff]
    %v1259 = vld [vmem:[#allocation10 + $0x68] sm:$0xff]
    %v1260 = vld [vmem:[#allocation10 + $0x70] sm:$0xff]
    %v1261 = vld [vmem:[#allocation10 + $0x78] sm:$0xff]
    %v1262 = vld [vmem:[#allocation10 + $0x80] sm:$0xff]
    %v1263 = vld [vmem:[#allocation10 + $0x88] sm:$0xff]
    %v1264 = vld [vmem:[#allocation10 + $0x90] sm:$0xff]
    %v1265 = vld [vmem:[#allocation10 + $0x98] sm:$0xff]
    %v1266 = vld [vmem:[#allocation10 + $0xa0] sm:$0xff]
    %v1267 = vld [vmem:[#allocation10 + $0xa8] sm:$0xff]
    %v1268 = vld [vmem:[#allocation10 + $0xb0] sm:$0xff]
    %v1269 = vld [vmem:[#allocation10 + $0xb8] sm:$0xff]
    %v1270 = vld [vmem:[#allocation10 + $0xc0] sm:$0xff]
    %v1271 = vld [vmem:[#allocation10 + $0xc8] sm:$0xff]
    %v1272 = vld [vmem:[#allocation10 + $0xd0] sm:$0xff]
    %v1273 = vld [vmem:[#allocation10 + $0xd8] sm:$0xff]
    %v1274 = vld [vmem:[#allocation10 + $0xe0] sm:$0xff]
    %v1275 = vld [vmem:[#allocation10 + $0xe8] sm:$0xff]
    %v1276 = vld [vmem:[#allocation10 + $0xf0] sm:$0xff]
    %v1277 = vld [vmem:[#allocation10 + $0xf8] sm:$0xff]
    %v1278 = vld [vmem:[#allocation10 + $0x100] sm:$0xff]
    %v1279 = vld [vmem:[#allocation10 + $0x108] sm:$0xff]
    %v1280 = vld [vmem:[#allocation10 + $0x110] sm:$0xff]
    %v1281 = vld [vmem:[#allocation10 + $0x118] sm:$0xff]
    %v1282 = vld [vmem:[#allocation10 + $0x120] sm:$0xff]
    %v1283 = vld [vmem:[#allocation10 + $0x128] sm:$0xff]
    %v1284 = vld [vmem:[#allocation10 + $0x130] sm:$0xff]
    %v1285 = vld [vmem:[#allocation10 + $0x138] sm:$0xff]
    %v1286 = vld [vmem:[#allocation10 + $0x140] sm:$0xff]
    %v1287 = vld [vmem:[#allocation10 + $0x148] sm:$0xff]
    %v1288 = vld [vmem:[#allocation10 + $0x150] sm:$0xff]
    %v1289 = vld [vmem:[#allocation10 + $0x158] sm:$0xff]
    %v1290 = vld [vmem:[#allocation10 + $0x160] sm:$0xff]
    %v1291 = vld [vmem:[#allocation10 + $0x168] sm:$0xff]
    %v1292 = vld [vmem:[#allocation10 + $0x170] sm:$0xff]
    %v1293 = vld [vmem:[#allocation10 + $0x178] sm:$0xff]
    %v1294 = vld [vmem:[#allocation10 + $0x180] sm:$0xff]
    %v1295 = vld [vmem:[#allocation10 + $0x188] sm:$0xff]
    %v1296 = vld [vmem:[#allocation10 + $0x190] sm:$0xff]
    %v1297 = vld [vmem:[#allocation10 + $0x198] sm:$0xff]
    %v1298 = vld [vmem:[#allocation10 + $0x1a0] sm:$0xff]
    %v1299 = vld [vmem:[#allocation10 + $0x1a8] sm:$0xff]
    %v1300 = vld [vmem:[#allocation10 + $0x1b0] sm:$0xff]
    %v1301 = vld [vmem:[#allocation10 + $0x1b8] sm:$0xff]
    %v1302 = vld [vmem:[#allocation10 + $0x1c0] sm:$0xff]
    %v1303 = vld [vmem:[#allocation10 + $0x1c8] sm:$0xff]
    %v1304 = vld [vmem:[#allocation10 + $0x1d0] sm:$0xff]
    %v1305 = vld [vmem:[#allocation10 + $0x1d8] sm:$0xff]
    %v1306 = vld [vmem:[#allocation10 + $0x1e0] sm:$0xff]
    %v1307 = vld [vmem:[#allocation10 + $0x1e8] sm:$0xff]
    %v1308 = vld [vmem:[#allocation10 + $0x1f0] sm:$0xff]
    %v1309 = vld [vmem:[#allocation10 + $0x1f8] sm:$0xff]
    %1310 = vmatpush.msra.mxu0 %v1276
    %1311 = vmatpush.msra.mxu0 %v1274
    %1312 = vmatpush.msra.mxu0 %v1272
    %1313 = vmatpush.msra.mxu0 %v1270
    %1314 = vmatpush.msra.mxu0 %v1268
    %1315 = vmatpush.msra.mxu0 %v1266
    %1316 = vmatpush.msra.mxu0 %v1264
    %1317 = vmatpush.msra.mxu0 %v1262
    %1318 = vmatpush.msra.mxu0 %v1260
    %1319 = vmatpush.msra.mxu0 %v1258
    %1320 = vmatpush.msra.mxu0 %v1256
    %1321 = vmatpush.msra.mxu0 %v1254
    %1322 = vmatpush.msra.mxu0 %v1252
    %1323 = vmatpush.msra.mxu0 %v1250
    %1324 = vmatpush.msra.mxu0 %v1248
    %1325 = vmatpush.msra.mxu0 %v1246
    %1326 = vmatmul.f32.gmra.mxu0 %v1244
    %v1327 = vpop.f32.mrf.mxu0
    %v1328 = vadd.f32 0.0, %v1327
    %1329 = vdwg.mxu0
    %1330 = vmatpush.msra.mxu0 %v1308
    %1331 = vmatpush.msra.mxu0 %v1306
    %1332 = vmatpush.msra.mxu0 %v1304
    %1333 = vmatpush.msra.mxu0 %v1302
    %1334 = vmatpush.msra.mxu0 %v1300
    %1335 = vmatpush.msra.mxu0 %v1298
    %1336 = vmatpush.msra.mxu0 %v1296
    %1337 = vmatpush.msra.mxu0 %v1294
    %1338 = vmatpush.msra.mxu0 %v1292
    %1339 = vmatpush.msra.mxu0 %v1290
    %1340 = vmatpush.msra.mxu0 %v1288
    %1341 = vmatpush.msra.mxu0 %v1286
    %1342 = vmatpush.msra.mxu0 %v1284
    %1343 = vmatpush.msra.mxu0 %v1282
    %1344 = vmatpush.msra.mxu0 %v1280
    %1345 = vmatpush.msra.mxu0 %v1278
    %1346 = vmatmul.f32.gmra.mxu0 %v1245
    %v1347 = vpop.f32.mrf.mxu0
    %v1348 = vadd.f32 %v1328, %v1347
    %1349 = vdwg.mxu0
    %1350 = vmatpush.msra.mxu0 %v1277
    %1351 = vmatpush.msra.mxu0 %v1275
    %1352 = vmatpush.msra.mxu0 %v1273
    %1353 = vmatpush.msra.mxu0 %v1271
    %1354 = vmatpush.msra.mxu0 %v1269
    %1355 = vmatpush.msra.mxu0 %v1267
    %1356 = vmatpush.msra.mxu0 %v1265
    %1357 = vmatpush.msra.mxu0 %v1263
    %1358 = vmatpush.msra.mxu0 %v1261
    %1359 = vmatpush.msra.mxu0 %v1259
    %1360 = vmatpush.msra.mxu0 %v1257
    %1361 = vmatpush.msra.mxu0 %v1255
    %1362 = vmatpush.msra.mxu0 %v1253
    %1363 = vmatpush.msra.mxu0 %v1251
    %1364 = vmatpush.msra.mxu0 %v1249
    %1365 = vmatpush.msra.mxu0 %v1247
    %1366 = vmatmul.f32.gmra.mxu0 %v1244
    %v1367 = vpop.f32.mrf.mxu0
    %v1368 = vadd.f32 0.0, %v1367
    %1369 = vdwg.mxu0
    %1370 = vmatpush.msra.mxu0 %v1309
    %1371 = vmatpush.msra.mxu0 %v1307
    %1372 = vmatpush.msra.mxu0 %v1305
    %1373 = vmatpush.msra.mxu0 %v1303
    %1374 = vmatpush.msra.mxu0 %v1301
    %1375 = vmatpush.msra.mxu0 %v1299
    %1376 = vmatpush.msra.mxu0 %v1297
    %1377 = vmatpush.msra.mxu0 %v1295
    %1378 = vmatpush.msra.mxu0 %v1293
    %1379 = vmatpush.msra.mxu0 %v1291
    %1380 = vmatpush.msra.mxu0 %v1289
    %1381 = vmatpush.msra.mxu0 %v1287
    %1382 = vmatpush.msra.mxu0 %v1285
    %1383 = vmatpush.msra.mxu0 %v1283
    %1384 = vmatpush.msra.mxu0 %v1281
    %1385 = vmatpush.msra.mxu0 %v1279
    %1386 = vmatmul.f32.gmra.mxu0 %v1245
    %v1387 = vpop.f32.mrf.mxu0
    %v1388 = vadd.f32 %v1368, %v1387
    %1389 = vdwg.mxu0
    %v1390 = vadd.f32 %v875, %v1348
    %v1391 = vadd.f32 %v915, %v1388
    %1392 = vst [vmem:[#allocation11] sm:$0xff] %v1390
    %1393 = vst [vmem:[#allocation11 + $0x8] sm:$0xff] %v1391
    // Predicated region
    $region78: #{qwen_block_cache_forward.1} parent=1 // pred_check
      _
    $region79: #{qwen_block_cache_forward.1} parent=1 // pred_check_branch
      %1395 = sbr.rel (0) target = $region81
    $region80: #{qwen_block_cache_forward.1} parent=1 // pred_region
      %1397 = vsyncadd [#allocation4], 0
      %s1399 = sshll.u32 [#allocation11], 4
      %s1400 = int_to_ptr.vmem [resolvable:$true] %s1399
      %s1401 = sshll.u32 %s14, 4
      %s1402 = int_to_ptr.hbm [resolvable:$true] %s1401
      %1404 = dma.vmem_to_hbm [thread:$0]  %s1400, 256, %s1402, [#allocation4]
    $region81: #{qwen_block_cache_forward.1} parent=1 // pred_fallthru
      _
    // Predicated region
    $region82: #{qwen_block_cache_forward.1} parent=1 // pred_check
      _
    $region83: #{qwen_block_cache_forward.1} parent=1 // pred_check_branch
      %1406 = sbr.rel (0) target = $region85
    $region84: #{qwen_block_cache_forward.1} parent=1 // pred_region
      _
    $region85: #{qwen_block_cache_forward.1} parent=1 // pred_fallthru
      _
    // Predicated region
    $region86: #{qwen_block_cache_forward.1} parent=1 // pred_check
      _
    $region87: #{qwen_block_cache_forward.1} parent=1 // pred_check_branch
      %1408 = sbr.rel (0) target = $region89
    $region88: #{qwen_block_cache_forward.1} parent=1 // pred_region
      _
    $region89: #{qwen_block_cache_forward.1} parent=1 // pred_fallthru
      _
    // Predicated region
    $region90: #{qwen_block_cache_forward.1} parent=1 // pred_check
      _
    $region91: #{qwen_block_cache_forward.1} parent=1 // pred_check_branch
      %1410 = sbr.rel (0) target = $region93
    $region92: #{qwen_block_cache_forward.1} parent=1 // pred_region
      %1412 = dma.done [#allocation4], 256
    $region93: #{qwen_block_cache_forward.1} parent=1 // pred_fallthru
      _
    // Predicated region
    $region94: #{qwen_block_cache_forward.1} parent=1 // pred_check
      _
    $region95: #{qwen_block_cache_forward.1} parent=1 // pred_check_branch
      %1414 = sbr.rel (0) target = $region97
    $region96: #{qwen_block_cache_forward.1} parent=1 // pred_region
      _
    $region97: #{qwen_block_cache_forward.1} parent=1 // pred_fallthru
      _
    // Predicated region
    $region98: #{qwen_block_cache_forward.1} parent=1 // pred_check
      _
    $region99: #{qwen_block_cache_forward.1} parent=1 // pred_check_branch
      %1416 = sbr.rel (0) target = $region101
    $region100: #{qwen_block_cache_forward.1} parent=1 // pred_region
      _
    $region101: #{qwen_block_cache_forward.1} parent=1 // pred_fallthru
      _
    %1417 = vsyncpa [#allocation3], 1
    %1418 = vsyncpa [#allocation6], 1
    %1419 = vsyncpa [#allocation9], 1
    %1420 = vsyncpa [#allocation4], 1

</llo_original>
